<compile_context>
chip_gen: v7x
topology: tpu7x:2x2x1
jax: 0.10.0
libtpu: 0.0.40
codegen_flags: <defaults>
</compile_context>

<pallas_src>
import functools
import math

import jax
import jax.numpy as jnp
from jax import lax
from jax.experimental import pallas as pl
from jax.experimental.pallas import tpu as pltpu


def _mha_flash_kernel(xq_ref, xkv_ref, wq_ref, wkv_ref, wo_ref, o_ref,
                      q_scr, m_scr, l_scr, acc_scr, *,
                      heads, head_dim, scale, approx_recip):
    # Block shapes:
    #   xq_ref  : (1, tq,  H)   activations for this (b, qi)       [Q side]
    #   xkv_ref : (1, tkv, H)   activations for this (b, ki)       [K/V side]
    #   wq_ref  : (H, H)        pre-transposed Wq      (y = x @ Wq_t)
    #   wkv_ref : (H, 2H)       pre-transposed [Wk | Wv]
    #   wo_ref  : (H, H)        pre-transposed Wo
    #   o_ref   : (1, tq, H)
    # Scratch:
    #   q_scr   : (tq, H)         projected (pre-scaled) Q, compute dtype
    #   m_scr   : (heads, tq, 1)  f32 running row max
    #   l_scr   : (heads, tq, 1)  f32 running row sum
    #   acc_scr : (heads, tq, hd) f32 running P@V accumulator
    H = heads * head_dim
    ki = pl.program_id(2)

    @pl.when(ki == 0)
    def _init():
        xq = xq_ref[0]                                           # (tq, H)
        q = jnp.dot(xq, wq_ref[...], preferred_element_type=jnp.float32)
        # Fold the 1/sqrt(hd) softmax scale into Q once per query tile.
        q_scr[...] = (q * scale).astype(q_scr.dtype)
        m_scr[...] = jnp.full(m_scr.shape, -jnp.inf, m_scr.dtype)
        l_scr[...] = jnp.zeros(l_scr.shape, l_scr.dtype)
        acc_scr[...] = jnp.zeros(acc_scr.shape, acc_scr.dtype)

    # K/V projection for this KV tile: one fused matmul in the input dtype.
    xkv = xkv_ref[0]                                             # (tkv, H)
    kv = jnp.dot(xkv, wkv_ref[...], preferred_element_type=jnp.float32)
    kv = kv.astype(xkv.dtype)                                    # (tkv, 2H)
    k = kv[:, :H]
    v = kv[:, H:]

    q = q_scr[...]                                               # (tq, H)

    # Contract the last dim of Q with the last dim of K (no in-kernel .T).
    qk_dims = (((1,), (1,)), ((), ()))
    # TODO(synk): for small head_dim a heads-batched dot_general would fill the
    # 256-wide MXU better; per-head loop kept for layout simplicity.
    for h in range(heads):
        lo = h * head_dim
        qh = q[:, lo:lo + head_dim]                              # (tq, hd)
        kh = k[:, lo:lo + head_dim]                              # (tkv, hd)
        vh = v[:, lo:lo + head_dim]                              # (tkv, hd)

        s = lax.dot_general(qh, kh, qk_dims,
                            preferred_element_type=jnp.float32)  # (tq, tkv)

        m_prev = m_scr[h]                                        # (tq, 1)
        m_new = jnp.maximum(m_prev, jnp.max(s, axis=-1, keepdims=True))
        alpha = jnp.exp(m_prev - m_new)                          # (tq, 1)
        p = jnp.exp(s - m_new)                                   # (tq, tkv) f32

        l_scr[h] = alpha * l_scr[h] + jnp.sum(p, axis=-1, keepdims=True)
        acc_scr[h] = alpha * acc_scr[h] + jnp.dot(
            p.astype(vh.dtype), vh, preferred_element_type=jnp.float32)
        m_scr[h] = m_new

    @pl.when(ki == pl.num_programs(2) - 1)
    def _finalize():
        # Normalize and fold the output projection into the per-head loop:
        # out = sum_h (acc_h / l_h) @ Wo_t[h*hd:(h+1)*hd, :]   (no head concat).
        out = jnp.zeros((q_scr.shape[0], H), jnp.float32)
        for h in range(heads):
            lo = h * head_dim
            inv_l = pl.reciprocal(l_scr[h], approx=approx_recip)  # (tq, 1)
            head_out = (acc_scr[h] * inv_l).astype(wo_ref.dtype)  # (tq, hd)
            out = out + jnp.dot(head_out, wo_ref[pl.ds(lo, head_dim), :],
                                preferred_element_type=jnp.float32)
        o_ref[0] = out.astype(o_ref.dtype)


def multi_head_attention(x, wq, wk, wv, wo, *, heads,
                         q_block=None, kv_block=None, approx_reciprocal=True):
    """x: (B, S, H); w*: (H, H) PyTorch layout (out_features, in_features).

    Matches MultiHeadAttention.forward(x, masked_input=None) with bias=False.
    Returns (B, S, H) in x.dtype.
    """
    B, S, H = x.shape
    assert H % heads == 0, "Hidden Units Modulo heads must be 0"
    head_dim = H // heads
    # TODO(synk): decoder masked_input (causal mask) path is not wired; this
    # kernel implements the encoder case (masked_input=None).

    dtype = x.dtype
    # Pre-transpose + fuse weights once, outside the kernel (no in-kernel .T):
    #   y = x @ W.T  ==  x @ W_t   with  W_t = W.T  (in_features, out_features)
    wq_t = wq.T.astype(dtype)
    wkv_t = jnp.concatenate([wk.T, wv.T], axis=1).astype(dtype)   # (H, 2H)
    wo_t = wo.T.astype(dtype)

    def pick(blk):
        if blk is not None:
            return blk
        for t in (256, 128, 64, 32, 16, 8):
            if t <= S and S % t == 0:
                return t
        return S

    tq = pick(q_block)
    tkv = pick(kv_block)
    assert S % tq == 0 and S % tkv == 0, "seq len must be divisible by tiles"
    nq, nkv = S // tq, S // tkv

    scale = 1.0 / math.sqrt(head_dim)
    kernel = functools.partial(_mha_flash_kernel, heads=heads,
                               head_dim=head_dim, scale=scale,
                               approx_recip=approx_reciprocal)

    # VMEM budget: double-buffered pipeline blocks + scratch, with headroom.
    isz = jnp.dtype(dtype).itemsize
    est = 2 * isz * (tq * H + tkv * H + tq * H)             # xq, xkv, out blocks
    est += 2 * isz * (H * H + H * 2 * H + H * H)            # weight blocks
    est += isz * tq * H + 4 * heads * tq * (2 + head_dim)   # scratch
    vmem_limit = int(min(max(2 * est, 32 * 1024 * 1024), 64 * 1024 * 1024))

    return pl.pallas_call(
        kernel,
        out_shape=jax.ShapeDtypeStruct((B, S, H), dtype),
        grid_spec=pltpu.PrefetchScalarGridSpec(
            num_scalar_prefetch=0,
            grid=(B, nq, nkv),
            in_specs=[
                pl.BlockSpec((1, tq, H), lambda b, qi, ki: (b, qi, 0)),   # x (Q)
                pl.BlockSpec((1, tkv, H), lambda b, qi, ki: (b, ki, 0)),  # x (KV)
                pl.BlockSpec((H, H), lambda b, qi, ki: (0, 0)),           # Wq_t
                pl.BlockSpec((H, 2 * H), lambda b, qi, ki: (0, 0)),       # [Wk|Wv]_t
                pl.BlockSpec((H, H), lambda b, qi, ki: (0, 0)),           # Wo_t
            ],
            out_specs=pl.BlockSpec((1, tq, H), lambda b, qi, ki: (b, qi, 0)),
            scratch_shapes=[
                pltpu.VMEM((tq, H), dtype),                       # cached Q
                pltpu.VMEM((heads, tq, 1), jnp.float32),          # m (row max)
                pltpu.VMEM((heads, tq, 1), jnp.float32),          # l (row sum)
                pltpu.VMEM((heads, tq, head_dim), jnp.float32),   # acc (P@V)
            ],
        ),
        compiler_params=pltpu.CompilerParams(
            dimension_semantics=("parallel", "parallel", "arbitrary"),
            vmem_limit_bytes=vmem_limit,
        ),
    )(x, x, wq_t, wkv_t, wo_t)


def _reference(x, wq, wk, wv, wo, *, heads):
    """Plain-JAX (f32) reference mirroring the PyTorch forward (mask=None)."""
    B, S, H = x.shape
    hd = H // heads
    q = x @ wq.T
    k = x @ wk.T
    v = x @ wv.T

    def split(t):  # (B, S, H) -> (B, heads, S, hd)
        return t.reshape(B, S, heads, hd).transpose(0, 2, 1, 3)

    q, k, v = split(q), split(k), split(v)
    scores = jnp.einsum("bhqd,bhkd->bhqk", q, k) / jnp.sqrt(jnp.float32(hd))
    attn = jax.nn.softmax(scores, axis=-1)
    out = jnp.einsum("bhqk,bhkd->bhqd", attn, v)
    out = out.transpose(0, 2, 1, 3).reshape(B, S, H)
    return out @ wo.T


if __name__ == "__main__":
    # Small shapes consistent with the module: batch=2, seq=32, hidden=32, 4 heads.
    B, S, H, HEADS = 2, 32, 32, 4

    key = jax.random.PRNGKey(0)
    kx, kq, kk, kv, ko = jax.random.split(key, 5)

    x = jax.random.normal(kx, (B, S, H), dtype=jnp.float32)
    # nn.Linear weights: shape (out_features, in_features), bias=False.
    wscale = 1.0 / math.sqrt(H)
    wq = jax.random.uniform(kq, (H, H), jnp.float32, -wscale, wscale)
    wk = jax.random.uniform(kk, (H, H), jnp.float32, -wscale, wscale)
    wv = jax.random.uniform(kv, (H, H), jnp.float32, -wscale, wscale)
    wo = jax.random.uniform(ko, (H, H), jnp.float32, -wscale, wscale)

    ref = _reference(x, wq, wk, wv, wo, heads=HEADS)

    # 1) f32 path, forced multi-tile flash grid (2 x 4 q-tiles x 4 kv-tiles)
    #    with exact reciprocal -> tight numerical check of the online softmax.
    out_f32 = multi_head_attention(x, wq, wk, wv, wo, heads=HEADS,
                                   q_block=8, kv_block=8,
                                   approx_reciprocal=False)
    out_f32 = jax.block_until_ready(out_f32)
    assert out_f32.shape == (B, S, H)
    assert jnp.allclose(out_f32, ref, atol=5e-4, rtol=5e-4), "f32 mismatch"

    # 2) bf16 fast path (native-dtype MXU operands, approx EUP reciprocal).
    xb, wqb, wkb, wvb, wob = (t.astype(jnp.bfloat16) for t in (x, wq, wk, wv, wo))
    out_bf16 = multi_head_attention(xb, wqb, wkb, wvb, wob, heads=HEADS)
    out_bf16 = jax.block_until_ready(out_bf16)
    assert out_bf16.shape == (B, S, H)
    assert jnp.allclose(out_bf16.astype(jnp.float32), ref,
                        atol=3e-2, rtol=3e-2), "bf16 mismatch"

    print("KERNEL_OK")
</pallas_src>

<mosaic_0001>
module attributes {stable_mosaic.version = 11 : i64} {
  func.func @_mha_flash_kernel(%arg0: i32, %arg1: i32, %arg2: i32, %arg3: memref<1x8x32xf32, #tpu.memory_space<vmem>>, %arg4: memref<1x8x32xf32, #tpu.memory_space<vmem>>, %arg5: memref<32x32xf32, #tpu.memory_space<vmem>>, %arg6: memref<32x64xf32, #tpu.memory_space<vmem>>, %arg7: memref<32x32xf32, #tpu.memory_space<vmem>>, %arg8: memref<1x8x32xf32, #tpu.memory_space<vmem>>, %arg9: memref<8x32xf32, #tpu.memory_space<vmem>>, %arg10: memref<4x8x1xf32, #tpu.memory_space<vmem>>, %arg11: memref<4x8x1xf32, #tpu.memory_space<vmem>>, %arg12: memref<4x8x8xf32, #tpu.memory_space<vmem>>) attributes {dimension_semantics = [#tpu.dimension_semantics<parallel>, #tpu.dimension_semantics<parallel>, #tpu.dimension_semantics<arbitrary>], iteration_bounds = array<i64: 2, 4, 4>, scalar_prefetch = 0 : i64, scratch_operands = 4 : i64, tpu.core_type = #tpu.core_type<tc>, window_params = [{transform_indices = @transform_0, window_bounds = array<i64: 1, 8, 32>}, {transform_indices = @transform_1, window_bounds = array<i64: 1, 8, 32>}, {pipeline_mode = #tpu.pipeline_mode<synchronous>, transform_indices = @transform_2, window_bounds = array<i64: 32, 32>}, {pipeline_mode = #tpu.pipeline_mode<synchronous>, transform_indices = @transform_3, window_bounds = array<i64: 32, 64>}, {pipeline_mode = #tpu.pipeline_mode<synchronous>, transform_indices = @transform_4, window_bounds = array<i64: 32, 32>}, {transform_indices = @transform_5, window_bounds = array<i64: 1, 8, 32>}]} {
    %c0_i32 = arith.constant 0 : i32
    %0 = arith.cmpi eq, %arg2, %c0_i32 : i32
    %1 = arith.extui %0 : i1 to i32
    %c0_i32_0 = arith.constant 0 : i32
    %2 = arith.cmpi ne, %1, %c0_i32_0 : i32
    scf.if %2 {
      %c0_93 = arith.constant 0 : index
      %c0_94 = arith.constant 0 : index
      %c0_95 = arith.constant 0 : index
      %153 = vector.load %arg3[%c0_93, %c0_94, %c0_95] : memref<1x8x32xf32, #tpu.memory_space<vmem>>, vector<1x8x32xf32>
      %154 = vector.shape_cast %153 : vector<1x8x32xf32> to vector<8x32xf32>
      %c0_96 = arith.constant 0 : index
      %c0_97 = arith.constant 0 : index
      %155 = vector.load %arg5[%c0_96, %c0_97] : memref<32x32xf32, #tpu.memory_space<vmem>>, vector<32x32xf32>
      %cst_98 = arith.constant dense<0.000000e+00> : vector<8x32xf32>
      %156 = tpu.matmul %154, %155, %cst_98 {dimension_numbers = #tpu.dot_dimension_numbers<[1], [0], [0], [1], [0, 0, 1, 1], [], []>} : vector<8x32xf32>, vector<32x32xf32>, vector<8x32xf32> -> vector<8x32xf32>
      %cst_99 = arith.constant 0.353553385 : f32
      %157 = vector.broadcast %cst_99 : f32 to vector<8x32xf32>
      %158 = arith.mulf %156, %157 : vector<8x32xf32>
      %c0_100 = arith.constant 0 : index
      %c0_101 = arith.constant 0 : index
      %159 = vector.load %arg9[%c0_100, %c0_101] : memref<8x32xf32, #tpu.memory_space<vmem>>, vector<8x32xf32>
      tpu.vector_store %arg9[%c0_100, %c0_101], %158 {strides = array<i32>} : memref<8x32xf32, #tpu.memory_space<vmem>>, vector<8x32xf32>,
      %cst_102 = arith.constant 0xFF800000 : f32
      %160 = vector.broadcast %cst_102 : f32 to vector<4x8x1xf32>
      %c0_103 = arith.constant 0 : index
      %c0_104 = arith.constant 0 : index
      %c0_105 = arith.constant 0 : index
      %161 = vector.load %arg10[%c0_103, %c0_104, %c0_105] : memref<4x8x1xf32, #tpu.memory_space<vmem>>, vector<4x8x1xf32>
      tpu.vector_store %arg10[%c0_103, %c0_104, %c0_105], %160 {strides = array<i32>} : memref<4x8x1xf32, #tpu.memory_space<vmem>>, vector<4x8x1xf32>,
      %cst_106 = arith.constant 0.000000e+00 : f32
      %162 = vector.broadcast %cst_106 : f32 to vector<4x8x1xf32>
      %c0_107 = arith.constant 0 : index
      %c0_108 = arith.constant 0 : index
      %c0_109 = arith.constant 0 : index
      %163 = vector.load %arg11[%c0_107, %c0_108, %c0_109] : memref<4x8x1xf32, #tpu.memory_space<vmem>>, vector<4x8x1xf32>
      tpu.vector_store %arg11[%c0_107, %c0_108, %c0_109], %162 {strides = array<i32>} : memref<4x8x1xf32, #tpu.memory_space<vmem>>, vector<4x8x1xf32>,
      %cst_110 = arith.constant 0.000000e+00 : f32
      %164 = vector.broadcast %cst_110 : f32 to vector<4x8x8xf32>
      %c0_111 = arith.constant 0 : index
      %c0_112 = arith.constant 0 : index
      %c0_113 = arith.constant 0 : index
      %165 = vector.load %arg12[%c0_111, %c0_112, %c0_113] : memref<4x8x8xf32, #tpu.memory_space<vmem>>, vector<4x8x8xf32>
      tpu.vector_store %arg12[%c0_111, %c0_112, %c0_113], %164 {strides = array<i32>} : memref<4x8x8xf32, #tpu.memory_space<vmem>>, vector<4x8x8xf32>,
    } else {
    }
    %c0 = arith.constant 0 : index
    %c0_1 = arith.constant 0 : index
    %c0_2 = arith.constant 0 : index
    %3 = vector.load %arg4[%c0, %c0_1, %c0_2] : memref<1x8x32xf32, #tpu.memory_space<vmem>>, vector<1x8x32xf32>
    %4 = vector.shape_cast %3 : vector<1x8x32xf32> to vector<8x32xf32>
    %c0_3 = arith.constant 0 : index
    %c0_4 = arith.constant 0 : index
    %5 = vector.load %arg6[%c0_3, %c0_4] : memref<32x64xf32, #tpu.memory_space<vmem>>, vector<32x64xf32>
    %cst = arith.constant dense<0.000000e+00> : vector<8x64xf32>
    %6 = tpu.matmul %4, %5, %cst {dimension_numbers = #tpu.dot_dimension_numbers<[1], [0], [0], [1], [0, 0, 1, 1], [], []>} : vector<8x32xf32>, vector<32x64xf32>, vector<8x64xf32> -> vector<8x64xf32>
    %7 = vector.extract_strided_slice %6 {offsets = [0, 0], sizes = [8, 32], strides = [1, 1]} : vector<8x64xf32> to vector<8x32xf32>
    %8 = vector.extract_strided_slice %6 {offsets = [0, 32], sizes = [8, 32], strides = [1, 1]} : vector<8x64xf32> to vector<8x32xf32>
    %c0_5 = arith.constant 0 : index
    %c0_6 = arith.constant 0 : index
    %9 = vector.load %arg9[%c0_5, %c0_6] : memref<8x32xf32, #tpu.memory_space<vmem>>, vector<8x32xf32>
    %10 = vector.extract_strided_slice %9 {offsets = [0, 0], sizes = [8, 8], strides = [1, 1]} : vector<8x32xf32> to vector<8x8xf32>
    %11 = vector.extract_strided_slice %7 {offsets = [0, 0], sizes = [8, 8], strides = [1, 1]} : vector<8x32xf32> to vector<8x8xf32>
    %12 = vector.extract_strided_slice %8 {offsets = [0, 0], sizes = [8, 8], strides = [1, 1]} : vector<8x32xf32> to vector<8x8xf32>
    %cst_7 = arith.constant dense<0.000000e+00> : vector<8x8xf32>
    %13 = tpu.matmul %10, %11, %cst_7 {dimension_numbers = #tpu.dot_dimension_numbers<[1], [1], [0], [0], [0, 0, 1, 0], [], []>} : vector<8x8xf32>, vector<8x8xf32>, vector<8x8xf32> -> vector<8x8xf32>
    %c0_8 = arith.constant 0 : index
    %c0_9 = arith.constant 0 : index
    %c0_10 = arith.constant 0 : index
    %14 = vector.load %arg10[%c0_8, %c0_9, %c0_10] : memref<4x8x1xf32, #tpu.memory_space<vmem>>, vector<1x8x1xf32>
    %15 = vector.shape_cast %14 : vector<1x8x1xf32> to vector<8x1xf32>
    %cst_11 = arith.constant dense<0xFF800000> : vector<8xf32>
    %16 = vector.multi_reduction <maximumf>, %13, %cst_11 [1] : vector<8x8xf32> to vector<8xf32>
    %17 = vector.shape_cast %16 : vector<8xf32> to vector<8x1xf32>
    %18 = arith.maximumf %15, %17 : vector<8x1xf32>
    %19 = arith.subf %15, %18 : vector<8x1xf32>
    %20 = math.exp %19 : vector<8x1xf32>
    %21 = vector.broadcast %18 : vector<8x1xf32> to vector<8x8xf32>
    %22 = arith.subf %13, %21 : vector<8x8xf32>
    %23 = math.exp %22 : vector<8x8xf32>
    %c0_12 = arith.constant 0 : index
    %c0_13 = arith.constant 0 : index
    %c0_14 = arith.constant 0 : index
    %24 = vector.load %arg11[%c0_12, %c0_13, %c0_14] : memref<4x8x1xf32, #tpu.memory_space<vmem>>, vector<1x8x1xf32>
    %25 = vector.shape_cast %24 : vector<1x8x1xf32> to vector<8x1xf32>
    %26 = arith.mulf %20, %25 : vector<8x1xf32>
    %cst_15 = arith.constant dense<0.000000e+00> : vector<8xf32>
    %27 = vector.multi_reduction <add>, %23, %cst_15 [1] : vector<8x8xf32> to vector<8xf32>
    %28 = vector.shape_cast %27 : vector<8xf32> to vector<8x1xf32>
    %29 = arith.addf %26, %28 : vector<8x1xf32>
    %c0_16 = arith.constant 0 : index
    %c0_17 = arith.constant 0 : index
    %c0_18 = arith.constant 0 : index
    %30 = vector.load %arg11[%c0_16, %c0_17, %c0_18] : memref<4x8x1xf32, #tpu.memory_space<vmem>>, vector<1x8x1xf32>
    %31 = vector.shape_cast %30 : vector<1x8x1xf32> to vector<8x1xf32>
    %32 = vector.shape_cast %29 : vector<8x1xf32> to vector<1x8x1xf32>
    tpu.vector_store %arg11[%c0_16, %c0_17, %c0_18], %32 {strides = array<i32>} : memref<4x8x1xf32, #tpu.memory_space<vmem>>, vector<1x8x1xf32>,
    %c0_19 = arith.constant 0 : index
    %c0_20 = arith.constant 0 : index
    %c0_21 = arith.constant 0 : index
    %33 = vector.load %arg12[%c0_19, %c0_20, %c0_21] : memref<4x8x8xf32, #tpu.memory_space<vmem>>, vector<1x8x8xf32>
    %34 = vector.shape_cast %33 : vector<1x8x8xf32> to vector<8x8xf32>
    %35 = vector.broadcast %20 : vector<8x1xf32> to vector<8x8xf32>
    %36 = arith.mulf %35, %34 : vector<8x8xf32>
    %cst_22 = arith.constant dense<0.000000e+00> : vector<8x8xf32>
    %37 = tpu.matmul %23, %12, %cst_22 {dimension_numbers = #tpu.dot_dimension_numbers<[1], [0], [0], [1], [0, 0, 1, 1], [], []>} : vector<8x8xf32>, vector<8x8xf32>, vector<8x8xf32> -> vector<8x8xf32>
    %38 = arith.addf %36, %37 : vector<8x8xf32>
    %c0_23 = arith.constant 0 : index
    %c0_24 = arith.constant 0 : index
    %c0_25 = arith.constant 0 : index
    %39 = vector.load %arg12[%c0_23, %c0_24, %c0_25] : memref<4x8x8xf32, #tpu.memory_space<vmem>>, vector<1x8x8xf32>
    %40 = vector.shape_cast %39 : vector<1x8x8xf32> to vector<8x8xf32>
    %41 = vector.shape_cast %38 : vector<8x8xf32> to vector<1x8x8xf32>
    tpu.vector_store %arg12[%c0_23, %c0_24, %c0_25], %41 {strides = array<i32>} : memref<4x8x8xf32, #tpu.memory_space<vmem>>, vector<1x8x8xf32>,
    %c0_26 = arith.constant 0 : index
    %c0_27 = arith.constant 0 : index
    %c0_28 = arith.constant 0 : index
    %42 = vector.load %arg10[%c0_26, %c0_27, %c0_28] : memref<4x8x1xf32, #tpu.memory_space<vmem>>, vector<1x8x1xf32>
    %43 = vector.shape_cast %42 : vector<1x8x1xf32> to vector<8x1xf32>
    %44 = vector.shape_cast %18 : vector<8x1xf32> to vector<1x8x1xf32>
    tpu.vector_store %arg10[%c0_26, %c0_27, %c0_28], %44 {strides = array<i32>} : memref<4x8x1xf32, #tpu.memory_space<vmem>>, vector<1x8x1xf32>,
    %45 = vector.extract_strided_slice %9 {offsets = [0, 8], sizes = [8, 8], strides = [1, 1]} : vector<8x32xf32> to vector<8x8xf32>
    %46 = vector.extract_strided_slice %7 {offsets = [0, 8], sizes = [8, 8], strides = [1, 1]} : vector<8x32xf32> to vector<8x8xf32>
    %47 = vector.extract_strided_slice %8 {offsets = [0, 8], sizes = [8, 8], strides = [1, 1]} : vector<8x32xf32> to vector<8x8xf32>
    %cst_29 = arith.constant dense<0.000000e+00> : vector<8x8xf32>
    %48 = tpu.matmul %45, %46, %cst_29 {dimension_numbers = #tpu.dot_dimension_numbers<[1], [1], [0], [0], [0, 0, 1, 0], [], []>} : vector<8x8xf32>, vector<8x8xf32>, vector<8x8xf32> -> vector<8x8xf32>
    %c1 = arith.constant 1 : index
    %c0_30 = arith.constant 0 : index
    %c0_31 = arith.constant 0 : index
    %49 = vector.load %arg10[%c1, %c0_30, %c0_31] : memref<4x8x1xf32, #tpu.memory_space<vmem>>, vector<1x8x1xf32>
    %50 = vector.shape_cast %49 : vector<1x8x1xf32> to vector<8x1xf32>
    %cst_32 = arith.constant dense<0xFF800000> : vector<8xf32>
    %51 = vector.multi_reduction <maximumf>, %48, %cst_32 [1] : vector<8x8xf32> to vector<8xf32>
    %52 = vector.shape_cast %51 : vector<8xf32> to vector<8x1xf32>
    %53 = arith.maximumf %50, %52 : vector<8x1xf32>
    %54 = arith.subf %50, %53 : vector<8x1xf32>
    %55 = math.exp %54 : vector<8x1xf32>
    %56 = vector.broadcast %53 : vector<8x1xf32> to vector<8x8xf32>
    %57 = arith.subf %48, %56 : vector<8x8xf32>
    %58 = math.exp %57 : vector<8x8xf32>
    %c1_33 = arith.constant 1 : index
    %c0_34 = arith.constant 0 : index
    %c0_35 = arith.constant 0 : index
    %59 = vector.load %arg11[%c1_33, %c0_34, %c0_35] : memref<4x8x1xf32, #tpu.memory_space<vmem>>, vector<1x8x1xf32>
    %60 = vector.shape_cast %59 : vector<1x8x1xf32> to vector<8x1xf32>
    %61 = arith.mulf %55, %60 : vector<8x1xf32>
    %cst_36 = arith.constant dense<0.000000e+00> : vector<8xf32>
    %62 = vector.multi_reduction <add>, %58, %cst_36 [1] : vector<8x8xf32> to vector<8xf32>
    %63 = vector.shape_cast %62 : vector<8xf32> to vector<8x1xf32>
    %64 = arith.addf %61, %63 : vector<8x1xf32>
    %c1_37 = arith.constant 1 : index
    %c0_38 = arith.constant 0 : index
    %c0_39 = arith.constant 0 : index
    %65 = vector.load %arg11[%c1_37, %c0_38, %c0_39] : memref<4x8x1xf32, #tpu.memory_space<vmem>>, vector<1x8x1xf32>
    %66 = vector.shape_cast %65 : vector<1x8x1xf32> to vector<8x1xf32>
    %67 = vector.shape_cast %64 : vector<8x1xf32> to vector<1x8x1xf32>
    tpu.vector_store %arg11[%c1_37, %c0_38, %c0_39], %67 {strides = array<i32>} : memref<4x8x1xf32, #tpu.memory_space<vmem>>, vector<1x8x1xf32>,
    %c1_40 = arith.constant 1 : index
    %c0_41 = arith.constant 0 : index
    %c0_42 = arith.constant 0 : index
    %68 = vector.load %arg12[%c1_40, %c0_41, %c0_42] : memref<4x8x8xf32, #tpu.memory_space<vmem>>, vector<1x8x8xf32>
    %69 = vector.shape_cast %68 : vector<1x8x8xf32> to vector<8x8xf32>
    %70 = vector.broadcast %55 : vector<8x1xf32> to vector<8x8xf32>
    %71 = arith.mulf %70, %69 : vector<8x8xf32>
    %cst_43 = arith.constant dense<0.000000e+00> : vector<8x8xf32>
    %72 = tpu.matmul %58, %47, %cst_43 {dimension_numbers = #tpu.dot_dimension_numbers<[1], [0], [0], [1], [0, 0, 1, 1], [], []>} : vector<8x8xf32>, vector<8x8xf32>, vector<8x8xf32> -> vector<8x8xf32>
    %73 = arith.addf %71, %72 : vector<8x8xf32>
    %c1_44 = arith.constant 1 : index
    %c0_45 = arith.constant 0 : index
    %c0_46 = arith.constant 0 : index
    %74 = vector.load %arg12[%c1_44, %c0_45, %c0_46] : memref<4x8x8xf32, #tpu.memory_space<vmem>>, vector<1x8x8xf32>
    %75 = vector.shape_cast %74 : vector<1x8x8xf32> to vector<8x8xf32>
    %76 = vector.shape_cast %73 : vector<8x8xf32> to vector<1x8x8xf32>
    tpu.vector_store %arg12[%c1_44, %c0_45, %c0_46], %76 {strides = array<i32>} : memref<4x8x8xf32, #tpu.memory_space<vmem>>, vector<1x8x8xf32>,
    %c1_47 = arith.constant 1 : index
    %c0_48 = arith.constant 0 : index
    %c0_49 = arith.constant 0 : index
    %77 = vector.load %arg10[%c1_47, %c0_48, %c0_49] : memref<4x8x1xf32, #tpu.memory_space<vmem>>, vector<1x8x1xf32>
    %78 = vector.shape_cast %77 : vector<1x8x1xf32> to vector<8x1xf32>
    %79 = vector.shape_cast %53 : vector<8x1xf32> to vector<1x8x1xf32>
    tpu.vector_store %arg10[%c1_47, %c0_48, %c0_49], %79 {strides = array<i32>} : memref<4x8x1xf32, #tpu.memory_space<vmem>>, vector<1x8x1xf32>,
    %80 = vector.extract_strided_slice %9 {offsets = [0, 16], sizes = [8, 8], strides = [1, 1]} : vector<8x32xf32> to vector<8x8xf32>
    %81 = vector.extract_strided_slice %7 {offsets = [0, 16], sizes = [8, 8], strides = [1, 1]} : vector<8x32xf32> to vector<8x8xf32>
    %82 = vector.extract_strided_slice %8 {offsets = [0, 16], sizes = [8, 8], strides = [1, 1]} : vector<8x32xf32> to vector<8x8xf32>
    %cst_50 = arith.constant dense<0.000000e+00> : vector<8x8xf32>
    %83 = tpu.matmul %80, %81, %cst_50 {dimension_numbers = #tpu.dot_dimension_numbers<[1], [1], [0], [0], [0, 0, 1, 0], [], []>} : vector<8x8xf32>, vector<8x8xf32>, vector<8x8xf32> -> vector<8x8xf32>
    %c2 = arith.constant 2 : index
    %c0_51 = arith.constant 0 : index
    %c0_52 = arith.constant 0 : index
    %84 = vector.load %arg10[%c2, %c0_51, %c0_52] : memref<4x8x1xf32, #tpu.memory_space<vmem>>, vector<1x8x1xf32>
    %85 = vector.shape_cast %84 : vector<1x8x1xf32> to vector<8x1xf32>
    %cst_53 = arith.constant dense<0xFF800000> : vector<8xf32>
    %86 = vector.multi_reduction <maximumf>, %83, %cst_53 [1] : vector<8x8xf32> to vector<8xf32>
    %87 = vector.shape_cast %86 : vector<8xf32> to vector<8x1xf32>
    %88 = arith.maximumf %85, %87 : vector<8x1xf32>
    %89 = arith.subf %85, %88 : vector<8x1xf32>
    %90 = math.exp %89 : vector<8x1xf32>
    %91 = vector.broadcast %88 : vector<8x1xf32> to vector<8x8xf32>
    %92 = arith.subf %83, %91 : vector<8x8xf32>
    %93 = math.exp %92 : vector<8x8xf32>
    %c2_54 = arith.constant 2 : index
    %c0_55 = arith.constant 0 : index
    %c0_56 = arith.constant 0 : index
    %94 = vector.load %arg11[%c2_54, %c0_55, %c0_56] : memref<4x8x1xf32, #tpu.memory_space<vmem>>, vector<1x8x1xf32>
    %95 = vector.shape_cast %94 : vector<1x8x1xf32> to vector<8x1xf32>
    %96 = arith.mulf %90, %95 : vector<8x1xf32>
    %cst_57 = arith.constant dense<0.000000e+00> : vector<8xf32>
    %97 = vector.multi_reduction <add>, %93, %cst_57 [1] : vector<8x8xf32> to vector<8xf32>
    %98 = vector.shape_cast %97 : vector<8xf32> to vector<8x1xf32>
    %99 = arith.addf %96, %98 : vector<8x1xf32>
    %c2_58 = arith.constant 2 : index
    %c0_59 = arith.constant 0 : index
    %c0_60 = arith.constant 0 : index
    %100 = vector.load %arg11[%c2_58, %c0_59, %c0_60] : memref<4x8x1xf32, #tpu.memory_space<vmem>>, vector<1x8x1xf32>
    %101 = vector.shape_cast %100 : vector<1x8x1xf32> to vector<8x1xf32>
    %102 = vector.shape_cast %99 : vector<8x1xf32> to vector<1x8x1xf32>
    tpu.vector_store %arg11[%c2_58, %c0_59, %c0_60], %102 {strides = array<i32>} : memref<4x8x1xf32, #tpu.memory_space<vmem>>, vector<1x8x1xf32>,
    %c2_61 = arith.constant 2 : index
    %c0_62 = arith.constant 0 : index
    %c0_63 = arith.constant 0 : index
    %103 = vector.load %arg12[%c2_61, %c0_62, %c0_63] : memref<4x8x8xf32, #tpu.memory_space<vmem>>, vector<1x8x8xf32>
    %104 = vector.shape_cast %103 : vector<1x8x8xf32> to vector<8x8xf32>
    %105 = vector.broadcast %90 : vector<8x1xf32> to vector<8x8xf32>
    %106 = arith.mulf %105, %104 : vector<8x8xf32>
    %cst_64 = arith.constant dense<0.000000e+00> : vector<8x8xf32>
    %107 = tpu.matmul %93, %82, %cst_64 {dimension_numbers = #tpu.dot_dimension_numbers<[1], [0], [0], [1], [0, 0, 1, 1], [], []>} : vector<8x8xf32>, vector<8x8xf32>, vector<8x8xf32> -> vector<8x8xf32>
    %108 = arith.addf %106, %107 : vector<8x8xf32>
    %c2_65 = arith.constant 2 : index
    %c0_66 = arith.constant 0 : index
    %c0_67 = arith.constant 0 : index
    %109 = vector.load %arg12[%c2_65, %c0_66, %c0_67] : memref<4x8x8xf32, #tpu.memory_space<vmem>>, vector<1x8x8xf32>
    %110 = vector.shape_cast %109 : vector<1x8x8xf32> to vector<8x8xf32>
    %111 = vector.shape_cast %108 : vector<8x8xf32> to vector<1x8x8xf32>
    tpu.vector_store %arg12[%c2_65, %c0_66, %c0_67], %111 {strides = array<i32>} : memref<4x8x8xf32, #tpu.memory_space<vmem>>, vector<1x8x8xf32>,
    %c2_68 = arith.constant 2 : index
    %c0_69 = arith.constant 0 : index
    %c0_70 = arith.constant 0 : index
    %112 = vector.load %arg10[%c2_68, %c0_69, %c0_70] : memref<4x8x1xf32, #tpu.memory_space<vmem>>, vector<1x8x1xf32>
    %113 = vector.shape_cast %112 : vector<1x8x1xf32> to vector<8x1xf32>
    %114 = vector.shape_cast %88 : vector<8x1xf32> to vector<1x8x1xf32>
    tpu.vector_store %arg10[%c2_68, %c0_69, %c0_70], %114 {strides = array<i32>} : memref<4x8x1xf32, #tpu.memory_space<vmem>>, vector<1x8x1xf32>,
    %115 = vector.extract_strided_slice %9 {offsets = [0, 24], sizes = [8, 8], strides = [1, 1]} : vector<8x32xf32> to vector<8x8xf32>
    %116 = vector.extract_strided_slice %7 {offsets = [0, 24], sizes = [8, 8], strides = [1, 1]} : vector<8x32xf32> to vector<8x8xf32>
    %117 = vector.extract_strided_slice %8 {offsets = [0, 24], sizes = [8, 8], strides = [1, 1]} : vector<8x32xf32> to vector<8x8xf32>
    %cst_71 = arith.constant dense<0.000000e+00> : vector<8x8xf32>
    %118 = tpu.matmul %115, %116, %cst_71 {dimension_numbers = #tpu.dot_dimension_numbers<[1], [1], [0], [0], [0, 0, 1, 0], [], []>} : vector<8x8xf32>, vector<8x8xf32>, vector<8x8xf32> -> vector<8x8xf32>
    %c3 = arith.constant 3 : index
    %c0_72 = arith.constant 0 : index
    %c0_73 = arith.constant 0 : index
    %119 = vector.load %arg10[%c3, %c0_72, %c0_73] : memref<4x8x1xf32, #tpu.memory_space<vmem>>, vector<1x8x1xf32>
    %120 = vector.shape_cast %119 : vector<1x8x1xf32> to vector<8x1xf32>
    %cst_74 = arith.constant dense<0xFF800000> : vector<8xf32>
    %121 = vector.multi_reduction <maximumf>, %118, %cst_74 [1] : vector<8x8xf32> to vector<8xf32>
    %122 = vector.shape_cast %121 : vector<8xf32> to vector<8x1xf32>
    %123 = arith.maximumf %120, %122 : vector<8x1xf32>
    %124 = arith.subf %120, %123 : vector<8x1xf32>
    %125 = math.exp %124 : vector<8x1xf32>
    %126 = vector.broadcast %123 : vector<8x1xf32> to vector<8x8xf32>
    %127 = arith.subf %118, %126 : vector<8x8xf32>
    %128 = math.exp %127 : vector<8x8xf32>
    %c3_75 = arith.constant 3 : index
    %c0_76 = arith.constant 0 : index
    %c0_77 = arith.constant 0 : index
    %129 = vector.load %arg11[%c3_75, %c0_76, %c0_77] : memref<4x8x1xf32, #tpu.memory_space<vmem>>, vector<1x8x1xf32>
    %130 = vector.shape_cast %129 : vector<1x8x1xf32> to vector<8x1xf32>
    %131 = arith.mulf %125, %130 : vector<8x1xf32>
    %cst_78 = arith.constant dense<0.000000e+00> : vector<8xf32>
    %132 = vector.multi_reduction <add>, %128, %cst_78 [1] : vector<8x8xf32> to vector<8xf32>
    %133 = vector.shape_cast %132 : vector<8xf32> to vector<8x1xf32>
    %134 = arith.addf %131, %133 : vector<8x1xf32>
    %c3_79 = arith.constant 3 : index
    %c0_80 = arith.constant 0 : index
    %c0_81 = arith.constant 0 : index
    %135 = vector.load %arg11[%c3_79, %c0_80, %c0_81] : memref<4x8x1xf32, #tpu.memory_space<vmem>>, vector<1x8x1xf32>
    %136 = vector.shape_cast %135 : vector<1x8x1xf32> to vector<8x1xf32>
    %137 = vector.shape_cast %134 : vector<8x1xf32> to vector<1x8x1xf32>
    tpu.vector_store %arg11[%c3_79, %c0_80, %c0_81], %137 {strides = array<i32>} : memref<4x8x1xf32, #tpu.memory_space<vmem>>, vector<1x8x1xf32>,
    %c3_82 = arith.constant 3 : index
    %c0_83 = arith.constant 0 : index
    %c0_84 = arith.constant 0 : index
    %138 = vector.load %arg12[%c3_82, %c0_83, %c0_84] : memref<4x8x8xf32, #tpu.memory_space<vmem>>, vector<1x8x8xf32>
    %139 = vector.shape_cast %138 : vector<1x8x8xf32> to vector<8x8xf32>
    %140 = vector.broadcast %125 : vector<8x1xf32> to vector<8x8xf32>
    %141 = arith.mulf %140, %139 : vector<8x8xf32>
    %cst_85 = arith.constant dense<0.000000e+00> : vector<8x8xf32>
    %142 = tpu.matmul %128, %117, %cst_85 {dimension_numbers = #tpu.dot_dimension_numbers<[1], [0], [0], [1], [0, 0, 1, 1], [], []>} : vector<8x8xf32>, vector<8x8xf32>, vector<8x8xf32> -> vector<8x8xf32>
    %143 = arith.addf %141, %142 : vector<8x8xf32>
    %c3_86 = arith.constant 3 : index
    %c0_87 = arith.constant 0 : index
    %c0_88 = arith.constant 0 : index
    %144 = vector.load %arg12[%c3_86, %c0_87, %c0_88] : memref<4x8x8xf32, #tpu.memory_space<vmem>>, vector<1x8x8xf32>
    %145 = vector.shape_cast %144 : vector<1x8x8xf32> to vector<8x8xf32>
    %146 = vector.shape_cast %143 : vector<8x8xf32> to vector<1x8x8xf32>
    tpu.vector_store %arg12[%c3_86, %c0_87, %c0_88], %146 {strides = array<i32>} : memref<4x8x8xf32, #tpu.memory_space<vmem>>, vector<1x8x8xf32>,
    %c3_89 = arith.constant 3 : index
    %c0_90 = arith.constant 0 : index
    %c0_91 = arith.constant 0 : index
    %147 = vector.load %arg10[%c3_89, %c0_90, %c0_91] : memref<4x8x1xf32, #tpu.memory_space<vmem>>, vector<1x8x1xf32>
    %148 = vector.shape_cast %147 : vector<1x8x1xf32> to vector<8x1xf32>
    %149 = vector.shape_cast %123 : vector<8x1xf32> to vector<1x8x1xf32>
    tpu.vector_store %arg10[%c3_89, %c0_90, %c0_91], %149 {strides = array<i32>} : memref<4x8x1xf32, #tpu.memory_space<vmem>>, vector<1x8x1xf32>,
    %c3_i32 = arith.constant 3 : i32
    %150 = arith.cmpi eq, %arg2, %c3_i32 : i32
    %151 = arith.extui %150 : i1 to i32
    %c0_i32_92 = arith.constant 0 : i32
    %152 = arith.cmpi ne, %151, %c0_i32_92 : i32
    scf.if %152 {
      %cst_93 = arith.constant 0.000000e+00 : f32
      %153 = vector.broadcast %cst_93 : f32 to vector<8x32xf32>
      %c0_94 = arith.constant 0 : index
      %c0_95 = arith.constant 0 : index
      %c0_96 = arith.constant 0 : index
      %154 = vector.load %arg11[%c0_94, %c0_95, %c0_96] : memref<4x8x1xf32, #tpu.memory_space<vmem>>, vector<1x8x1xf32>
      %155 = vector.shape_cast %154 : vector<1x8x1xf32> to vector<8x1xf32>
      %156 = tpu.reciprocal %155 : vector<8x1xf32> -> vector<8x1xf32>
      %c0_97 = arith.constant 0 : index
      %c0_98 = arith.constant 0 : index
      %c0_99 = arith.constant 0 : index
      %157 = vector.load %arg12[%c0_97, %c0_98, %c0_99] : memref<4x8x8xf32, #tpu.memory_space<vmem>>, vector<1x8x8xf32>
      %158 = vector.shape_cast %157 : vector<1x8x8xf32> to vector<8x8xf32>
      %159 = vector.broadcast %156 : vector<8x1xf32> to vector<8x8xf32>
      %160 = arith.mulf %158, %159 : vector<8x8xf32>
      %c0_100 = arith.constant 0 : index
      %c0_101 = arith.constant 0 : index
      %161 = vector.load %arg7[%c0_100, %c0_101] : memref<32x32xf32, #tpu.memory_space<vmem>>, vector<8x32xf32>
      %cst_102 = arith.constant dense<0.000000e+00> : vector<8x32xf32>
      %162 = tpu.matmul %160, %161, %cst_102 {dimension_numbers = #tpu.dot_dimension_numbers<[1], [0], [0], [1], [0, 0, 1, 1], [], []>} : vector<8x8xf32>, vector<8x32xf32>, vector<8x32xf32> -> vector<8x32xf32>
      %163 = arith.addf %153, %162 : vector<8x32xf32>
      %c1_103 = arith.constant 1 : index
      %c0_104 = arith.constant 0 : index
      %c0_105 = arith.constant 0 : index
      %164 = vector.load %arg11[%c1_103, %c0_104, %c0_105] : memref<4x8x1xf32, #tpu.memory_space<vmem>>, vector<1x8x1xf32>
      %165 = vector.shape_cast %164 : vector<1x8x1xf32> to vector<8x1xf32>
      %166 = tpu.reciprocal %165 : vector<8x1xf32> -> vector<8x1xf32>
      %c1_106 = arith.constant 1 : index
      %c0_107 = arith.constant 0 : index
      %c0_108 = arith.constant 0 : index
      %167 = vector.load %arg12[%c1_106, %c0_107, %c0_108] : memref<4x8x8xf32, #tpu.memory_space<vmem>>, vector<1x8x8xf32>
      %168 = vector.shape_cast %167 : vector<1x8x8xf32> to vector<8x8xf32>
      %169 = vector.broadcast %166 : vector<8x1xf32> to vector<8x8xf32>
      %170 = arith.mulf %168, %169 : vector<8x8xf32>
      %c8 = arith.constant 8 : index
      %c0_109 = arith.constant 0 : index
      %171 = vector.load %arg7[%c8, %c0_109] : memref<32x32xf32, #tpu.memory_space<vmem>>, vector<8x32xf32>
      %cst_110 = arith.constant dense<0.000000e+00> : vector<8x32xf32>
      %172 = tpu.matmul %170, %171, %cst_110 {dimension_numbers = #tpu.dot_dimension_numbers<[1], [0], [0], [1], [0, 0, 1, 1], [], []>} : vector<8x8xf32>, vector<8x32xf32>, vector<8x32xf32> -> vector<8x32xf32>
      %173 = arith.addf %163, %172 : vector<8x32xf32>
      %c2_111 = arith.constant 2 : index
      %c0_112 = arith.constant 0 : index
      %c0_113 = arith.constant 0 : index
      %174 = vector.load %arg11[%c2_111, %c0_112, %c0_113] : memref<4x8x1xf32, #tpu.memory_space<vmem>>, vector<1x8x1xf32>
      %175 = vector.shape_cast %174 : vector<1x8x1xf32> to vector<8x1xf32>
      %176 = tpu.reciprocal %175 : vector<8x1xf32> -> vector<8x1xf32>
      %c2_114 = arith.constant 2 : index
      %c0_115 = arith.constant 0 : index
      %c0_116 = arith.constant 0 : index
      %177 = vector.load %arg12[%c2_114, %c0_115, %c0_116] : memref<4x8x8xf32, #tpu.memory_space<vmem>>, vector<1x8x8xf32>
      %178 = vector.shape_cast %177 : vector<1x8x8xf32> to vector<8x8xf32>
      %179 = vector.broadcast %176 : vector<8x1xf32> to vector<8x8xf32>
      %180 = arith.mulf %178, %179 : vector<8x8xf32>
      %c16 = arith.constant 16 : index
      %c0_117 = arith.constant 0 : index
      %181 = vector.load %arg7[%c16, %c0_117] : memref<32x32xf32, #tpu.memory_space<vmem>>, vector<8x32xf32>
      %cst_118 = arith.constant dense<0.000000e+00> : vector<8x32xf32>
      %182 = tpu.matmul %180, %181, %cst_118 {dimension_numbers = #tpu.dot_dimension_numbers<[1], [0], [0], [1], [0, 0, 1, 1], [], []>} : vector<8x8xf32>, vector<8x32xf32>, vector<8x32xf32> -> vector<8x32xf32>
      %183 = arith.addf %173, %182 : vector<8x32xf32>
      %c3_119 = arith.constant 3 : index
      %c0_120 = arith.constant 0 : index
      %c0_121 = arith.constant 0 : index
      %184 = vector.load %arg11[%c3_119, %c0_120, %c0_121] : memref<4x8x1xf32, #tpu.memory_space<vmem>>, vector<1x8x1xf32>
      %185 = vector.shape_cast %184 : vector<1x8x1xf32> to vector<8x1xf32>
      %186 = tpu.reciprocal %185 : vector<8x1xf32> -> vector<8x1xf32>
      %c3_122 = arith.constant 3 : index
      %c0_123 = arith.constant 0 : index
      %c0_124 = arith.constant 0 : index
      %187 = vector.load %arg12[%c3_122, %c0_123, %c0_124] : memref<4x8x8xf32, #tpu.memory_space<vmem>>, vector<1x8x8xf32>
      %188 = vector.shape_cast %187 : vector<1x8x8xf32> to vector<8x8xf32>
      %189 = vector.broadcast %186 : vector<8x1xf32> to vector<8x8xf32>
      %190 = arith.mulf %188, %189 : vector<8x8xf32>
      %c24 = arith.constant 24 : index
      %c0_125 = arith.constant 0 : index
      %191 = vector.load %arg7[%c24, %c0_125] : memref<32x32xf32, #tpu.memory_space<vmem>>, vector<8x32xf32>
      %cst_126 = arith.constant dense<0.000000e+00> : vector<8x32xf32>
      %192 = tpu.matmul %190, %191, %cst_126 {dimension_numbers = #tpu.dot_dimension_numbers<[1], [0], [0], [1], [0, 0, 1, 1], [], []>} : vector<8x8xf32>, vector<8x32xf32>, vector<8x32xf32> -> vector<8x32xf32>
      %193 = arith.addf %183, %192 : vector<8x32xf32>
      %c0_127 = arith.constant 0 : index
      %c0_128 = arith.constant 0 : index
      %c0_129 = arith.constant 0 : index
      %194 = vector.load %arg8[%c0_127, %c0_128, %c0_129] : memref<1x8x32xf32, #tpu.memory_space<vmem>>, vector<1x8x32xf32>
      %195 = vector.shape_cast %194 : vector<1x8x32xf32> to vector<8x32xf32>
      %196 = vector.shape_cast %193 : vector<8x32xf32> to vector<1x8x32xf32>
      tpu.vector_store %arg8[%c0_127, %c0_128, %c0_129], %196 {strides = array<i32>} : memref<1x8x32xf32, #tpu.memory_space<vmem>>, vector<1x8x32xf32>,
    } else {
    }
    return
  }
  func.func @transform_0(%arg0: i32, %arg1: i32, %arg2: i32) -> (i32, i32, i32) {
    %c0_i32 = arith.constant 0 : i32
    %c0_i32_0 = arith.constant 0 : i32
    return %arg0, %arg1, %c0_i32 : i32, i32, i32
  }
  func.func @transform_1(%arg0: i32, %arg1: i32, %arg2: i32) -> (i32, i32, i32) {
    %c0_i32 = arith.constant 0 : i32
    %c0_i32_0 = arith.constant 0 : i32
    return %arg0, %arg2, %c0_i32 : i32, i32, i32
  }
  func.func @transform_2(%arg0: i32, %arg1: i32, %arg2: i32) -> (i32, i32) {
    %c0_i32 = arith.constant 0 : i32
    %c0_i32_0 = arith.constant 0 : i32
    %c0_i32_1 = arith.constant 0 : i32
    return %c0_i32, %c0_i32_0 : i32, i32
  }
  func.func @transform_3(%arg0: i32, %arg1: i32, %arg2: i32) -> (i32, i32) {
    %c0_i32 = arith.constant 0 : i32
    %c0_i32_0 = arith.constant 0 : i32
    %c0_i32_1 = arith.constant 0 : i32
    return %c0_i32, %c0_i32_0 : i32, i32
  }
  func.func @transform_4(%arg0: i32, %arg1: i32, %arg2: i32) -> (i32, i32) {
    %c0_i32 = arith.constant 0 : i32
    %c0_i32_0 = arith.constant 0 : i32
    %c0_i32_1 = arith.constant 0 : i32
    return %c0_i32, %c0_i32_0 : i32, i32
  }
  func.func @transform_5(%arg0: i32, %arg1: i32, %arg2: i32) -> (i32, i32, i32) {
    %c0_i32 = arith.constant 0 : i32
    %c0_i32_0 = arith.constant 0 : i32
    return %arg0, %arg1, %c0_i32 : i32, i32, i32
  }
}

</mosaic_0001>

<llo_original>
// kernel: tpu_custom_call.1
$region0: #{tpu_custom_call.1}
  #allocation0 [shape = 'u32[]', space=smem, size = 0x4, offset = 0x4, fixed_abs, tag = 'smem constant byte address 0x4 - core index']
  #allocation1 [shape = 'u32[144,128]{1,0:T(1,128)}', space=vmem, size = 0x12000, scoped, tag = 'internal scratch']
  #allocation2 [shape = 'f32[8,32]{1,0:T(8,128)}', space=vmem, size = 0x1000, scoped, tag = 'scratch operand']
  #allocation3 [shape = 'f32[4,8,1]{2,1,0:T(8,128)}', space=vmem, size = 0x4000, scoped, tag = 'scratch operand']
  #allocation4 [shape = 'f32[4,8,1]{2,1,0:T(8,128)}', space=vmem, size = 0x4000, scoped, tag = 'scratch operand']
  #allocation5 [shape = 'f32[4,8,8]{2,1,0:T(8,128)}', space=vmem, size = 0x4000, scoped, tag = 'scratch operand']
  %s0 = inlined_call_operand.hbm [shape: f32[2,32,32], index: 0, kind: input, shape index: {}]
  %s1 = inlined_call_operand.hbm [shape: f32[2,32,32], index: 1, kind: input, shape index: {}]
  %s2 = inlined_call_operand.hbm [shape: f32[32,32], index: 2, kind: input, shape index: {}]
  %s3 = inlined_call_operand.hbm [shape: f32[32,64], index: 3, kind: input, shape index: {}]
  %s4 = inlined_call_operand.hbm [shape: f32[32,32], index: 4, kind: input, shape index: {}]
  %s5 = inlined_call_operand.hbm [shape: f32[2,32,32], index: 5, kind: output, shape index: {}]
  %s6 = sld [smem:[#allocation0]]
  $region81: #{tpu_custom_call.1} parent=0
    _
  %s8 = ssub.s32 1, %s6
  %s9 = scalar_select 0, %s8, %s6
  $region1: #{tpu_custom_call.1} parent=0
    #allocation6 [shape = 'u8[8192]{0}', space=vmem, size = 0x2000, scoped, tag = 'input window, operand 0']
    #allocation7 [shape = 's32[2]{0}', space=sflag, size = 0x8, scoped, tag = 'scoped memory for tpu_custom_call.1']
    #allocation8 [shape = 's32[2]{0}', space=sflag, size = 0x8, scoped, tag = 'scoped memory for tpu_custom_call.1']
    #allocation9 [shape = 'u8[8192]{0}', space=vmem, size = 0x2000, scoped, tag = 'input window, operand 1']
    #allocation10 [shape = 's32[2]{0}', space=sflag, size = 0x8, scoped, tag = 'scoped memory for tpu_custom_call.1']
    #allocation11 [shape = 'u8[16384]{0}', space=vmem, size = 0x4000, scoped, tag = 'input window, operand 2, single buffered']
    #allocation12 [shape = 'u8[16384]{0}', space=vmem, size = 0x4000, scoped, tag = 'input window, operand 3, single buffered']
    #allocation13 [shape = 's32[1]{0}', space=sflag, size = 0x4, scoped, tag = 'scoped memory for tpu_custom_call.1']
    #allocation14 [shape = 'u8[16384]{0}', space=vmem, size = 0x4000, scoped, tag = 'input window, operand 4, single buffered']
    #allocation15 [shape = 'u8[8192]{0}', space=vmem, size = 0x2000, scoped, tag = 'output window, operand 0']
    %10 = vsyncpa [#allocation7], 0
    %s11 = scalar_lea.sflag [#allocation7], 1
    %12 = vsyncpa %s11, 0
    %13 = vsyncpa [#allocation10], 0
    %s14 = scalar_lea.sflag [#allocation10], 1
    %15 = vsyncpa %s14, 0
    %16 = vsyncpa [#allocation13], 0
    %17 = vsyncpa [#allocation8], 0
    %s18 = scalar_lea.sflag [#allocation8], 1
    %19 = vsyncpa %s18, 0
    loop: start=0, step=1, limit=34
    $region2: #{tpu_custom_call.1} parent=1 // loop_pre_header
      _
    $region3: #{tpu_custom_call.1} parent=1 // loop_header
      %s21 = sphi 0, %s25
      %p22 = scmp.ge.s32.totalorder %s21, 34
      %s28 = sphi 0, %s47
      %s29 = sphi 0, %s43
      %s30 = sphi 0, %s39
      %s31 = sphi 0, %s28
      %s32 = sphi 0, %s29
      %s33 = sphi 0, %s30
      %s34 = sphi 0, %s31
      %s35 = sphi 0, %s32
      %s36 = sphi 0, %s33
      %s52 = sphi 0, %s54
      %s55 = sphi 0, %s52
      %s56 = sphi 0, %s55
      %s72 = sphi 0, %s56
      %s80 = sphi 0, %s82
      %s83 = sphi 0, %s80
      %s84 = sphi 0, %s83
      %s100 = sphi 0, %s84
      %s104 = sphi 0, %s104
      %s106 = sphi 0, %s104
      %s107 = sphi 0, %s106
      %s121 = sphi 0, %s107
      %s125 = sphi 0, %s125
      %s127 = sphi 0, %s125
      %s128 = sphi 0, %s127
      %s142 = sphi 0, %s128
      %s146 = sphi 0, %s146
      %s148 = sphi 0, %s146
      %s149 = sphi 0, %s148
      %s163 = sphi 0, %s149
      %s171 = sphi 0, %s173
      %s174 = sphi 0, %s171
      %s175 = sphi 0, %s174
      %s191 = sphi 0, %s175
    $region4: #{tpu_custom_call.1} parent=1 // loop_header_branch
      %24 = sbr.rel (%p22) target = $region8
    $region5: #{tpu_custom_call.1} parent=1 // loop_body
      %s26 = ssub.s32 %s21, 1
      %s27 = ssub.s32 %s21, 2
      %s37 = sadd.s32 1, %s30
      %p38 = scmp.ge.s32.totalorder %s37, 4
      %s39 = scalar_select %p38, 0, %s37
      %s40 = sadd.s32 1, %s29
      %s41 = scalar_select %p38, %s40, %s29
      %p42 = scmp.ge.s32.totalorder %s41, 4
      %s43 = scalar_select %p42, 0, %s41
      %s44 = sadd.s32 1, %s28
      %s45 = scalar_select %p42, %s44, %s28
      %p46 = scmp.ge.s32.totalorder %s45, 2
      %s47 = scalar_select %p46, 0, %s45
      %s48 = ssub.s32 %s28, %s47
      %s49 = ssub.s32 %s29, %s43
      %s50 = sor.u32 %s48, %s49
      %p51 = scmp.eq.s32.totalorder %s50, 0
      %s53 = sadd.s32 %s52, 1
      %s54 = scalar_select %p51, %s52, %s53
      %p57 = pneg %p51
      %p58 = scmp.eq.s32.totalorder %s21, 31
      %p59 = por %p57, %p58
      %p60 = scmp.ne.s32.totalorder %s52, %s55
      %p61 = scmp.eq.s32.totalorder %s21, 0
      %p62 = por %p60, %p61
      %p63 = scmp.ne.s32.totalorder %s52, %s55
      %p64 = scmp.eq.s32.totalorder %s26, 31
      %p65 = por %p63, %p64
      %p66 = scmp.ne.s32.totalorder %s55, %s56
      %p67 = scmp.eq.s32.totalorder %s26, 0
      %p68 = por %p66, %p67
      %p69 = scmp.ne.s32.totalorder %s55, %s56
      %p70 = scmp.eq.s32.totalorder %s27, 31
      %p71 = por %p69, %p70
      %p73 = scmp.ne.s32.totalorder %s56, %s72
      %p74 = scmp.eq.s32.totalorder %s27, 0
      %p75 = por %p73, %p74
      %s76 = ssub.s32 %s28, %s47
      %s77 = ssub.s32 %s30, %s39
      %s78 = sor.u32 %s76, %s77
      %p79 = scmp.eq.s32.totalorder %s78, 0
      %s81 = sadd.s32 %s80, 1
      %s82 = scalar_select %p79, %s80, %s81
      %p85 = pneg %p79
      %p86 = scmp.eq.s32.totalorder %s21, 31
      %p87 = por %p85, %p86
      %p88 = scmp.ne.s32.totalorder %s80, %s83
      %p89 = scmp.eq.s32.totalorder %s21, 0
      %p90 = por %p88, %p89
      %p91 = scmp.ne.s32.totalorder %s80, %s83
      %p92 = scmp.eq.s32.totalorder %s26, 31
      %p93 = por %p91, %p92
      %p94 = scmp.ne.s32.totalorder %s83, %s84
      %p95 = scmp.eq.s32.totalorder %s26, 0
      %p96 = por %p94, %p95
      %p97 = scmp.ne.s32.totalorder %s83, %s84
      %p98 = scmp.eq.s32.totalorder %s27, 31
      %p99 = por %p97, %p98
      %p101 = scmp.ne.s32.totalorder %s84, %s100
      %p102 = scmp.eq.s32.totalorder %s27, 0
      %p103 = por %p101, %p102
      %s105 = sadd.s32 %s104, 1
      %p108 = scmp.eq.s32.totalorder %s21, 31
      %p109 = scmp.ne.s32.totalorder %s104, %s106
      %p110 = scmp.eq.s32.totalorder %s21, 0
      %p111 = por %p109, %p110
      %p112 = scmp.ne.s32.totalorder %s104, %s106
      %p113 = scmp.eq.s32.totalorder %s26, 31
      %p114 = por %p112, %p113
      %p115 = scmp.ne.s32.totalorder %s106, %s107
      %p116 = scmp.eq.s32.totalorder %s26, 0
      %p117 = por %p115, %p116
      %p118 = scmp.ne.s32.totalorder %s106, %s107
      %p119 = scmp.eq.s32.totalorder %s27, 31
      %p120 = por %p118, %p119
      %p122 = scmp.ne.s32.totalorder %s107, %s121
      %p123 = scmp.eq.s32.totalorder %s27, 0
      %p124 = por %p122, %p123
      %s126 = sadd.s32 %s125, 1
      %p129 = scmp.eq.s32.totalorder %s21, 31
      %p130 = scmp.ne.s32.totalorder %s125, %s127
      %p131 = scmp.eq.s32.totalorder %s21, 0
      %p132 = por %p130, %p131
      %p133 = scmp.ne.s32.totalorder %s125, %s127
      %p134 = scmp.eq.s32.totalorder %s26, 31
      %p135 = por %p133, %p134
      %p136 = scmp.ne.s32.totalorder %s127, %s128
      %p137 = scmp.eq.s32.totalorder %s26, 0
      %p138 = por %p136, %p137
      %p139 = scmp.ne.s32.totalorder %s127, %s128
      %p140 = scmp.eq.s32.totalorder %s27, 31
      %p141 = por %p139, %p140
      %p143 = scmp.ne.s32.totalorder %s128, %s142
      %p144 = scmp.eq.s32.totalorder %s27, 0
      %p145 = por %p143, %p144
      %s147 = sadd.s32 %s146, 1
      %p150 = scmp.eq.s32.totalorder %s21, 31
      %p151 = scmp.ne.s32.totalorder %s146, %s148
      %p152 = scmp.eq.s32.totalorder %s21, 0
      %p153 = por %p151, %p152
      %p154 = scmp.ne.s32.totalorder %s146, %s148
      %p155 = scmp.eq.s32.totalorder %s26, 31
      %p156 = por %p154, %p155
      %p157 = scmp.ne.s32.totalorder %s148, %s149
      %p158 = scmp.eq.s32.totalorder %s26, 0
      %p159 = por %p157, %p158
      %p160 = scmp.ne.s32.totalorder %s148, %s149
      %p161 = scmp.eq.s32.totalorder %s27, 31
      %p162 = por %p160, %p161
      %p164 = scmp.ne.s32.totalorder %s149, %s163
      %p165 = scmp.eq.s32.totalorder %s27, 0
      %p166 = por %p164, %p165
      %s167 = ssub.s32 %s28, %s47
      %s168 = ssub.s32 %s29, %s43
      %s169 = sor.u32 %s167, %s168
      %p170 = scmp.eq.s32.totalorder %s169, 0
      %s172 = sadd.s32 %s171, 1
      %s173 = scalar_select %p170, %s171, %s172
      %p176 = pneg %p170
      %p177 = scmp.eq.s32.totalorder %s21, 31
      %p178 = por %p176, %p177
      %p179 = scmp.ne.s32.totalorder %s171, %s174
      %p180 = scmp.eq.s32.totalorder %s21, 0
      %p181 = por %p179, %p180
      %p182 = scmp.ne.s32.totalorder %s171, %s174
      %p183 = scmp.eq.s32.totalorder %s26, 31
      %p184 = por %p182, %p183
      %p185 = scmp.ne.s32.totalorder %s174, %s175
      %p186 = scmp.eq.s32.totalorder %s26, 0
      %p187 = por %p185, %p186
      %p188 = scmp.ne.s32.totalorder %s174, %s175
      %p189 = scmp.eq.s32.totalorder %s27, 31
      %p190 = por %p188, %p189
      %p192 = scmp.ne.s32.totalorder %s175, %s191
      %p193 = scmp.eq.s32.totalorder %s27, 0
      %p194 = por %p192, %p193
      %p195 = scmp.le.s32.totalorder 1, %s21
      %p196 = scmp.lt.s32.totalorder %s21, 33
      %p197 = pnand %p195, %p196
      %p198 = pneg %p197
      // Predicated region
      $region9: #{tpu_custom_call.1} parent=5 // pred_check
        _
      $region10: #{tpu_custom_call.1} parent=5 // pred_check_branch
        %200 = sbr.rel (%p197) target = $region12
      $region11: #{tpu_custom_call.1} parent=5 // pred_region
        %s201 = ssub.s32 %s21, 1
        // Predicated region
        $region13: #{tpu_custom_call.1} parent=11 // pred_check
          %p202 = pneg %p117
        $region14: #{tpu_custom_call.1} parent=11 // pred_check_branch
          %204 = sbr.rel (%p202) target = $region16
        $region15: #{tpu_custom_call.1} parent=11 // pred_region
          %s206 = ssub.s32 512, 512
          %207 = vsyncadd [#allocation10], %s206
          %s208 = sshll.u32 [#allocation11], 4
          %s209 = int_to_ptr.vmem [resolvable:$true] %s208
          %214 = dma.hbm_to_vmem [thread:$0]  %s2, 512, %s209, [#allocation10], 128, 128, 8
        $region16: #{tpu_custom_call.1} parent=11 // pred_fallthru
          _
        // Predicated region
        $region17: #{tpu_custom_call.1} parent=11 // pred_check
          %p215 = pneg %p138
        $region18: #{tpu_custom_call.1} parent=11 // pred_check_branch
          %217 = sbr.rel (%p215) target = $region20
        $region19: #{tpu_custom_call.1} parent=11 // pred_region
          %s219 = ssub.s32 512, 512
          %220 = vsyncadd [#allocation13], %s219
          %s221 = sshll.u32 [#allocation12], 4
          %s222 = int_to_ptr.vmem [resolvable:$true] %s221
          %227 = dma.hbm_to_vmem [thread:$0]  %s3, 512, %s222, [#allocation13], 128, 128, 8
        $region20: #{tpu_custom_call.1} parent=11 // pred_fallthru
          _
        // Predicated region
        $region21: #{tpu_custom_call.1} parent=11 // pred_check
          %p228 = pneg %p159
        $region22: #{tpu_custom_call.1} parent=11 // pred_check_branch
          %230 = sbr.rel (%p228) target = $region24
        $region23: #{tpu_custom_call.1} parent=11 // pred_region
          %s232 = ssub.s32 512, 512
          %233 = vsyncadd [#allocation13], %s232
          %s234 = sshll.u32 [#allocation14], 4
          %s235 = int_to_ptr.vmem [resolvable:$true] %s234
          %240 = dma.hbm_to_vmem [thread:$0]  %s4, 512, %s235, [#allocation13], 128, 128, 8
        $region24: #{tpu_custom_call.1} parent=11 // pred_fallthru
          _
      $region12: #{tpu_custom_call.1} parent=5 // pred_fallthru
        _
      %p241 = scmp.lt.s32.totalorder %s21, 32
      // Predicated region
      $region25: #{tpu_custom_call.1} parent=5 // pred_check
        %p242 = pneg %p241
      $region26: #{tpu_custom_call.1} parent=5 // pred_check_branch
        %244 = sbr.rel (%p242) target = $region28
      $region27: #{tpu_custom_call.1} parent=5 // pred_region
        // Predicated region
        $region29: #{tpu_custom_call.1} parent=27 // pred_check
          %p245 = pneg %p62
        $region30: #{tpu_custom_call.1} parent=27 // pred_check_branch
          %247 = sbr.rel (%p245) target = $region32
        $region31: #{tpu_custom_call.1} parent=27 // pred_region
          %s248 = sand.u32 %s52, 1
          %s249 = scalar_lea.sflag [#allocation7], %s248
          %s250 = sand.u32 %s52, 1
          %s251 = smul.addr %s250, 8
          %s252 = scalar_lea.vmem [#allocation6], %s251
          %s254 = ssub.s32 128, 128
          %255 = vsyncadd %s249, %s254
          %s256 = smul.addr %s28, 4
          %s257 = sadd.s32 %s29, %s256
          %s258 = smul.addr %s257, 128
          %s259 = scalar_lea.hbm %s0, %s258
          %s261 = sshll.u32 %s252, 4
          %s262 = int_to_ptr.vmem [resolvable:$true] %s261
          %264 = dma.hbm_to_vmem [thread:$0]  %s259, 128, %s262, %s249
        $region32: #{tpu_custom_call.1} parent=27 // pred_fallthru
          _
        // Predicated region
        $region33: #{tpu_custom_call.1} parent=27 // pred_check
          %p265 = pneg %p90
        $region34: #{tpu_custom_call.1} parent=27 // pred_check_branch
          %267 = sbr.rel (%p265) target = $region36
        $region35: #{tpu_custom_call.1} parent=27 // pred_region
          %s268 = sand.u32 %s21, 1
          %s269 = scalar_lea.sflag [#allocation10], %s268
          %s270 = sand.u32 %s80, 1
          %s271 = smul.addr %s270, 8
          %s272 = scalar_lea.vmem [#allocation9], %s271
          %s274 = ssub.s32 128, 128
          %275 = vsyncadd %s269, %s274
          %s276 = smul.addr %s28, 4
          %s277 = sadd.s32 %s30, %s276
          %s278 = smul.addr %s277, 128
          %s279 = scalar_lea.hbm %s1, %s278
          %s281 = sshll.u32 %s272, 4
          %s282 = int_to_ptr.vmem [resolvable:$true] %s281
          %284 = dma.hbm_to_vmem [thread:$0]  %s279, 128, %s282, %s269
        $region36: #{tpu_custom_call.1} parent=27 // pred_fallthru
          _
      $region28: #{tpu_custom_call.1} parent=5 // pred_fallthru
        _
      %p285 = scmp.le.s32.totalorder 1, %s21
      %p286 = scmp.lt.s32.totalorder %s21, 33
      %p287 = pnand %p285, %p286
      %p288 = pneg %p287
      // Predicated region
      $region37: #{tpu_custom_call.1} parent=5 // pred_check
        _
      $region38: #{tpu_custom_call.1} parent=5 // pred_check_branch
        %290 = sbr.rel (%p287) target = $region40
      $region39: #{tpu_custom_call.1} parent=5 // pred_region
        %s291 = ssub.s32 %s21, 1
        %s292 = sand.u32 %s55, 1
        %s293 = scalar_lea.sflag [#allocation7], %s292
        %s294 = sand.u32 %s55, 1
        %s295 = smul.addr %s294, 8
        %s296 = scalar_lea.vmem [#allocation6], %s295
        // Predicated region
        $region41: #{tpu_custom_call.1} parent=39 // pred_check
          %p297 = pneg %p68
        $region42: #{tpu_custom_call.1} parent=39 // pred_check_branch
          %299 = sbr.rel (%p297) target = $region44
        $region43: #{tpu_custom_call.1} parent=39 // pred_region
          %300 = dma.done %s293, 128
        $region44: #{tpu_custom_call.1} parent=39 // pred_fallthru
          _
        %s301 = sand.u32 %s26, 1
        %s302 = scalar_lea.sflag [#allocation10], %s301
        %s303 = sand.u32 %s83, 1
        %s304 = smul.addr %s303, 8
        %s305 = scalar_lea.vmem [#allocation9], %s304
        // Predicated region
        $region45: #{tpu_custom_call.1} parent=39 // pred_check
          %p306 = pneg %p96
        $region46: #{tpu_custom_call.1} parent=39 // pred_check_branch
          %308 = sbr.rel (%p306) target = $region48
        $region47: #{tpu_custom_call.1} parent=39 // pred_region
          %309 = dma.done %s302, 128
        $region48: #{tpu_custom_call.1} parent=39 // pred_fallthru
          _
        // Predicated region
        $region49: #{tpu_custom_call.1} parent=39 // pred_check
          %p310 = pneg %p117
        $region50: #{tpu_custom_call.1} parent=39 // pred_check_branch
          %312 = sbr.rel (%p310) target = $region52
        $region51: #{tpu_custom_call.1} parent=39 // pred_region
          %313 = dma.done [#allocation10], 512
        $region52: #{tpu_custom_call.1} parent=39 // pred_fallthru
          _
        // Predicated region
        $region53: #{tpu_custom_call.1} parent=39 // pred_check
          %p314 = pneg %p138
        $region54: #{tpu_custom_call.1} parent=39 // pred_check_branch
          %316 = sbr.rel (%p314) target = $region56
        $region55: #{tpu_custom_call.1} parent=39 // pred_region
          %317 = dma.done [#allocation13], 512
        $region56: #{tpu_custom_call.1} parent=39 // pred_fallthru
          _
        // Predicated region
        $region57: #{tpu_custom_call.1} parent=39 // pred_check
          %p318 = pneg %p159
        $region58: #{tpu_custom_call.1} parent=39 // pred_check_branch
          %320 = sbr.rel (%p318) target = $region60
        $region59: #{tpu_custom_call.1} parent=39 // pred_region
          %321 = dma.done [#allocation13], 512
        $region60: #{tpu_custom_call.1} parent=39 // pred_fallthru
          _
        %s322 = sand.u32 %s55, 1
        %s323 = scalar_lea.sflag [#allocation7], %s322
        %s324 = sand.u32 %s55, 1
        %s325 = smul.addr %s324, 8
        %s326 = scalar_lea.vmem [#allocation6], %s325
        %p327 = pneg %p68
        %p328 = pneg %p65
        %s329 = sand.u32 %s26, 1
        %s330 = scalar_lea.sflag [#allocation10], %s329
        %s331 = sand.u32 %s83, 1
        %s332 = smul.addr %s331, 8
        %s333 = scalar_lea.vmem [#allocation9], %s332
        %p334 = pneg %p96
        %p335 = pneg %p93
        %p336 = pneg %p117
        %p337 = pneg %p114
        %p338 = pneg %p138
        %p339 = pneg %p135
        %p340 = pneg %p159
        %p341 = pneg %p156
        %p342 = pneg %p187
        %p343 = pneg %p184
        %s344 = sand.u32 %s174, 1
        %s345 = scalar_lea.sflag [#allocation8], %s344
        %s346 = sand.u32 %s174, 1
        %s347 = smul.addr %s346, 8
        %s348 = scalar_lea.vmem [#allocation15], %s347
        %p349 = scmp.eq.s32.totalorder %s33, 0
        // Predicated region
        $region61: #{tpu_custom_call.1} parent=39 // pred_check
          %p350 = pneg %p349
        $region62: #{tpu_custom_call.1} parent=39 // pred_check_branch
          %352 = sbr.rel (%p350) target = $region64
        $region63: #{tpu_custom_call.1} parent=39 // pred_region
          %v353 = vld [vmem:[%s296] sm:$0xff]
          %v354 = vld [vmem:[#allocation11] sm:$0xff]
          %v355 = vld [vmem:[#allocation11 + $0x8] sm:$0xff]
          %v356 = vld [vmem:[#allocation11 + $0x10] sm:$0xff]
          %v357 = vld [vmem:[#allocation11 + $0x18] sm:$0xff]
          %vm358 = vcmask 261120
          %v360 = vsel %vm358, %v353, 0
          %362 = vmatprep.subr.mxu0 0.0
          %363 = vmatpush1.msra.mxu0 %v354
          %364 = vmatprep.subr.mxu0 0.0
          %365 = vmatpush1.msra.mxu0 %v355
          %366 = vmatprep.subr.mxu0 0.0
          %367 = vmatpush1.msra.mxu0 %v356
          %368 = vmatprep.subr.mxu0 0.0
          %369 = vmatpush1.msra.mxu0 %v357
          %370 = vmatprep.subr.mxu0 0.0
          %371 = vmatpush1.msra.mxu0 0.0
          %372 = vmatprep.subr.mxu0 0.0
          %373 = vmatpush1.msra.mxu0 0.0
          %374 = vmatprep.subr.mxu0 0.0
          %375 = vmatpush1.msra.mxu0 0.0
          %376 = vmatprep.subr.mxu0 0.0
          %377 = vmatpush1.msra.mxu0 0.0
          %378 = vmatprep.subr.mxu0 0.0
          %379 = vmatpush1.msra.mxu0 0.0
          %380 = vmatprep.subr.mxu0 0.0
          %381 = vmatpush1.msra.mxu0 0.0
          %382 = vmatprep.subr.mxu0 0.0
          %383 = vmatpush1.msra.mxu0 0.0
          %384 = vmatprep.subr.mxu0 0.0
          %385 = vmatpush1.msra.mxu0 0.0
          %386 = vmatprep.subr.mxu0 0.0
          %387 = vmatpush1.msra.mxu0 0.0
          %388 = vmatprep.subr.mxu0 0.0
          %389 = vmatpush1.msra.mxu0 0.0
          %390 = vmatprep.subr.mxu0 0.0
          %391 = vmatpush1.msra.mxu0 0.0
          %392 = vmatprep.subr.mxu0 0.0
          %393 = vmatpush1.msra.mxu0 0.0
          %394 = vmatprep.subr.mxu0 0.0
          %395 = vmatpush1.msra.mxu0 0.0
          %396 = vmatprep.subr.mxu0 0.0
          %397 = vmatpush1.msra.mxu0 0.0
          %398 = vmatprep.subr.mxu0 0.0
          %399 = vmatpush1.msra.mxu0 0.0
          %400 = vmatprep.subr.mxu0 0.0
          %401 = vmatpush1.msra.mxu0 0.0
          %402 = vmatprep.subr.mxu0 0.0
          %403 = vmatpush1.msra.mxu0 0.0
          %404 = vmatprep.subr.mxu0 0.0
          %405 = vmatpush1.msra.mxu0 0.0
          %406 = vmatprep.subr.mxu0 0.0
          %407 = vmatpush1.msra.mxu0 0.0
          %408 = vmatprep.subr.mxu0 0.0
          %409 = vmatpush1.msra.mxu0 0.0
          %410 = vmatprep.subr.mxu0 0.0
          %411 = vmatpush1.msra.mxu0 0.0
          %412 = vmatprep.subr.mxu0 0.0
          %413 = vmatpush1.msra.mxu0 0.0
          %414 = vmatprep.subr.mxu0 0.0
          %415 = vmatpush1.msra.mxu0 0.0
          %416 = vmatprep.subr.mxu0 0.0
          %417 = vmatpush1.msra.mxu0 0.0
          %418 = vmatprep.subr.mxu0 0.0
          %419 = vmatpush1.msra.mxu0 0.0
          %420 = vmatprep.subr.mxu0 0.0
          %421 = vmatpush1.msra.mxu0 0.0
          %422 = vmatprep.subr.mxu0 0.0
          %423 = vmatpush1.msra.mxu0 0.0
          %424 = vmatprep.subr.mxu0 0.0
          %425 = vmatpush1.msra.mxu0 0.0
          %426 = vmatprep.mubr.f32.mxu0 0.0
          %427 = vmatmul.mubr.f32.gmra.mrb[0].mxu0 %v360
          %v428 = vpop.f32.mrb[0].mxu0
          %v429 = vadd.f32 0.0, %v428
          %v430 = vpop.f32.mrb[0].mxu0
          %431 = vdwg.mxu0
          %v432 = vmul.f32 %v429, 0.35355338
          %433 = vst.msk [vmem:[#allocation2] sm:$0xff] %vm358, %v432
          %vm434 = vcmask 7168
          %435 = vst.msk [vmem:[#allocation3] sm:$0xff] %vm434, -inf
          %436 = vst.msk [vmem:[#allocation3 + $0x8] sm:$0xff] %vm434, -inf
          %437 = vst.msk [vmem:[#allocation3 + $0x10] sm:$0xff] %vm434, -inf
          %438 = vst.msk [vmem:[#allocation3 + $0x18] sm:$0xff] %vm434, -inf
          %439 = vst.msk [vmem:[#allocation4] sm:$0xff] %vm434, 0.0
          %440 = vst.msk [vmem:[#allocation4 + $0x8] sm:$0xff] %vm434, 0.0
          %441 = vst.msk [vmem:[#allocation4 + $0x10] sm:$0xff] %vm434, 0.0
          %442 = vst.msk [vmem:[#allocation4 + $0x18] sm:$0xff] %vm434, 0.0
          %vm443 = vcmask 64512
          %444 = vst.msk [vmem:[#allocation5] sm:$0xff] %vm443, 0.0
          %445 = vst.msk [vmem:[#allocation5 + $0x8] sm:$0xff] %vm443, 0.0
          %446 = vst.msk [vmem:[#allocation5 + $0x10] sm:$0xff] %vm443, 0.0
          %447 = vst.msk [vmem:[#allocation5 + $0x18] sm:$0xff] %vm443, 0.0
        $region64: #{tpu_custom_call.1} parent=39 // pred_fallthru
          _
        %v448 = vld [vmem:[%s305] sm:$0xff]
        %v449 = vld [vmem:[#allocation12] sm:$0xff]
        %v450 = vld [vmem:[#allocation12 + $0x8] sm:$0xff]
        %v451 = vld [vmem:[#allocation12 + $0x10] sm:$0xff]
        %v452 = vld [vmem:[#allocation12 + $0x18] sm:$0xff]
        %vm453 = vcmask 261120
        %v455 = vsel %vm453, %v448, 0
        %457 = vmatprep.subr.mxu0 0.0
        %458 = vmatpush1.msra.mxu0 %v449
        %459 = vmatprep.subr.mxu0 0.0
        %460 = vmatpush1.msra.mxu0 %v450
        %461 = vmatprep.subr.mxu0 0.0
        %462 = vmatpush1.msra.mxu0 %v451
        %463 = vmatprep.subr.mxu0 0.0
        %464 = vmatpush1.msra.mxu0 %v452
        %465 = vmatprep.subr.mxu0 0.0
        %466 = vmatpush1.msra.mxu0 0.0
        %467 = vmatprep.subr.mxu0 0.0
        %468 = vmatpush1.msra.mxu0 0.0
        %469 = vmatprep.subr.mxu0 0.0
        %470 = vmatpush1.msra.mxu0 0.0
        %471 = vmatprep.subr.mxu0 0.0
        %472 = vmatpush1.msra.mxu0 0.0
        %473 = vmatprep.subr.mxu0 0.0
        %474 = vmatpush1.msra.mxu0 0.0
        %475 = vmatprep.subr.mxu0 0.0
        %476 = vmatpush1.msra.mxu0 0.0
        %477 = vmatprep.subr.mxu0 0.0
        %478 = vmatpush1.msra.mxu0 0.0
        %479 = vmatprep.subr.mxu0 0.0
        %480 = vmatpush1.msra.mxu0 0.0
        %481 = vmatprep.subr.mxu0 0.0
        %482 = vmatpush1.msra.mxu0 0.0
        %483 = vmatprep.subr.mxu0 0.0
        %484 = vmatpush1.msra.mxu0 0.0
        %485 = vmatprep.subr.mxu0 0.0
        %486 = vmatpush1.msra.mxu0 0.0
        %487 = vmatprep.subr.mxu0 0.0
        %488 = vmatpush1.msra.mxu0 0.0
        %489 = vmatprep.subr.mxu0 0.0
        %490 = vmatpush1.msra.mxu0 0.0
        %491 = vmatprep.subr.mxu0 0.0
        %492 = vmatpush1.msra.mxu0 0.0
        %493 = vmatprep.subr.mxu0 0.0
        %494 = vmatpush1.msra.mxu0 0.0
        %495 = vmatprep.subr.mxu0 0.0
        %496 = vmatpush1.msra.mxu0 0.0
        %497 = vmatprep.subr.mxu0 0.0
        %498 = vmatpush1.msra.mxu0 0.0
        %499 = vmatprep.subr.mxu0 0.0
        %500 = vmatpush1.msra.mxu0 0.0
        %501 = vmatprep.subr.mxu0 0.0
        %502 = vmatpush1.msra.mxu0 0.0
        %503 = vmatprep.subr.mxu0 0.0
        %504 = vmatpush1.msra.mxu0 0.0
        %505 = vmatprep.subr.mxu0 0.0
        %506 = vmatpush1.msra.mxu0 0.0
        %507 = vmatprep.subr.mxu0 0.0
        %508 = vmatpush1.msra.mxu0 0.0
        %509 = vmatprep.subr.mxu0 0.0
        %510 = vmatpush1.msra.mxu0 0.0
        %511 = vmatprep.subr.mxu0 0.0
        %512 = vmatpush1.msra.mxu0 0.0
        %513 = vmatprep.subr.mxu0 0.0
        %514 = vmatpush1.msra.mxu0 0.0
        %515 = vmatprep.subr.mxu0 0.0
        %516 = vmatpush1.msra.mxu0 0.0
        %517 = vmatprep.subr.mxu0 0.0
        %518 = vmatpush1.msra.mxu0 0.0
        %519 = vmatprep.subr.mxu0 0.0
        %520 = vmatpush1.msra.mxu0 0.0
        %521 = vmatprep.mubr.f32.mxu0 0.0
        %522 = vmatmul.mubr.f32.gmra.mrb[0].mxu0 %v455
        %v523 = vpop.f32.mrb[0].mxu0
        %v524 = vadd.f32 0.0, %v523
        %v525 = vpop.f32.mrb[0].mxu0
        %526 = vdwg.mxu0
        %v527 = vld [vmem:[#allocation2] sm:$0xff]
        %vm528 = vcmask 64512
        %v530 = vsel %vm528, %v527, 0
        %v533 = vsel %vm528, %v524, 0
        %535 = vmatprep.subr.mxu0 0.0
        %536 = vmatpush1.xpose.msra.mxu0 %v533
        %537 = vmatprep.subr.mxu0 0.0
        %538 = vmatpush1.xpose.msra.mxu0 0.0
        %539 = vmatprep.subr.mxu0 0.0
        %540 = vmatpush1.xpose.msra.mxu0 0.0
        %541 = vmatprep.subr.mxu0 0.0
        %542 = vmatpush1.xpose.msra.mxu0 0.0
        %543 = vmatprep.subr.mxu0 0.0
        %544 = vmatpush1.xpose.msra.mxu0 0.0
        %545 = vmatprep.subr.mxu0 0.0
        %546 = vmatpush1.xpose.msra.mxu0 0.0
        %547 = vmatprep.subr.mxu0 0.0
        %548 = vmatpush1.xpose.msra.mxu0 0.0
        %549 = vmatprep.subr.mxu0 0.0
        %550 = vmatpush1.xpose.msra.mxu0 0.0
        %551 = vmatprep.subr.mxu0 0.0
        %552 = vmatpush1.xpose.msra.mxu0 0.0
        %553 = vmatprep.subr.mxu0 0.0
        %554 = vmatpush1.xpose.msra.mxu0 0.0
        %555 = vmatprep.subr.mxu0 0.0
        %556 = vmatpush1.xpose.msra.mxu0 0.0
        %557 = vmatprep.subr.mxu0 0.0
        %558 = vmatpush1.xpose.msra.mxu0 0.0
        %559 = vmatprep.subr.mxu0 0.0
        %560 = vmatpush1.xpose.msra.mxu0 0.0
        %561 = vmatprep.subr.mxu0 0.0
        %562 = vmatpush1.xpose.msra.mxu0 0.0
        %563 = vmatprep.subr.mxu0 0.0
        %564 = vmatpush1.xpose.msra.mxu0 0.0
        %565 = vmatprep.subr.mxu0 0.0
        %566 = vmatpush1.xpose.msra.mxu0 0.0
        %567 = vmatprep.subr.mxu0 0.0
        %568 = vmatpush1.xpose.msra.mxu0 0.0
        %569 = vmatprep.subr.mxu0 0.0
        %570 = vmatpush1.xpose.msra.mxu0 0.0
        %571 = vmatprep.subr.mxu0 0.0
        %572 = vmatpush1.xpose.msra.mxu0 0.0
        %573 = vmatprep.subr.mxu0 0.0
        %574 = vmatpush1.xpose.msra.mxu0 0.0
        %575 = vmatprep.subr.mxu0 0.0
        %576 = vmatpush1.xpose.msra.mxu0 0.0
        %577 = vmatprep.subr.mxu0 0.0
        %578 = vmatpush1.xpose.msra.mxu0 0.0
        %579 = vmatprep.subr.mxu0 0.0
        %580 = vmatpush1.xpose.msra.mxu0 0.0
        %581 = vmatprep.subr.mxu0 0.0
        %582 = vmatpush1.xpose.msra.mxu0 0.0
        %583 = vmatprep.subr.mxu0 0.0
        %584 = vmatpush1.xpose.msra.mxu0 0.0
        %585 = vmatprep.subr.mxu0 0.0
        %586 = vmatpush1.xpose.msra.mxu0 0.0
        %587 = vmatprep.subr.mxu0 0.0
        %588 = vmatpush1.xpose.msra.mxu0 0.0
        %589 = vmatprep.subr.mxu0 0.0
        %590 = vmatpush1.xpose.msra.mxu0 0.0
        %591 = vmatprep.subr.mxu0 0.0
        %592 = vmatpush1.xpose.msra.mxu0 0.0
        %593 = vmatprep.subr.mxu0 0.0
        %594 = vmatpush1.xpose.msra.mxu0 0.0
        %595 = vmatprep.subr.mxu0 0.0
        %596 = vmatpush1.xpose.msra.mxu0 0.0
        %597 = vmatprep.subr.mxu0 0.0
        %598 = vmatpush1.xpose.msra.mxu0 0.0
        %599 = vmatprep.mubr.f32.mxu0 0.0
        %600 = vmatmul.mubr.f32.gmra.mrb[0].mxu0 %v530
        %v601 = vpop.f32.mrb[0].mxu0
        %v602 = vadd.f32 0.0, %v601
        %v603 = vpop.f32.mrb[0].mxu0
        %604 = vdwg.mxu0
        %v605 = vld [vmem:[#allocation3] sm:$0xff]
        %v606 = vsel %vm528, %v602, -inf
        %607 = vmax.xlane.f32.xlu0 %v606
        %v608 = vpop.xlane.xlu0 %607
        %v609 = vmax.f32 %v605, %v608
        %v610 = vsub.f32 %v605, %v609
        %v611 = vmul.f32 %v610, 1.442695
        %v612 = vpow.pop %v611
        %614 = vset.pattern.permute.xlu0 0
        %615 = vperm.xlu0 %614, %v609
        %v616 = vpop.permute.xlu0 %615
        %v618 = vsub.f32 %v602, %v616
        %v619 = vmul.f32 %v618, 1.442695
        %v620 = vpow.pop %v619
        %v621 = vld [vmem:[#allocation4] sm:$0xff]
        %v622 = vmul.f32 %v612, %v621
        %v623 = vsel %vm528, %v620, 0.0
        %624 = vadd.xlane.f32.xlu0 %v623
        %v625 = vpop.xlane.xlu0 %624
        %v626 = vadd.f32 %v622, %v625
        %vm627 = vcmask 7168
        %628 = vst.msk [vmem:[#allocation4] sm:$0xff] %vm627, %v626
        %v629 = vld [vmem:[#allocation5] sm:$0xff]
        %631 = vset.pattern.permute.xlu0 0
        %632 = vperm.xlu0 %631, %v612
        %v633 = vpop.permute.xlu0 %632
        %v635 = vmul.f32 %v633, %v629
        %636 = vrot.lane.b32.xlu0 %v524, 96
        %v637 = vpop.permute.xlu0 %636
        %v640 = vsel %vm528, %v620, 0
        %642 = vmatprep.subr.mxu0 0.0
        %643 = vmatpush1.msra.mxu0 %v637
        %644 = vmatprep.subr.mxu0 0.0
        %645 = vmatpush1.msra.mxu0 0.0
        %646 = vmatprep.subr.mxu0 0.0
        %647 = vmatpush1.msra.mxu0 0.0
        %648 = vmatprep.subr.mxu0 0.0
        %649 = vmatpush1.msra.mxu0 0.0
        %650 = vmatprep.subr.mxu0 0.0
        %651 = vmatpush1.msra.mxu0 0.0
        %652 = vmatprep.subr.mxu0 0.0
        %653 = vmatpush1.msra.mxu0 0.0
        %654 = vmatprep.subr.mxu0 0.0
        %655 = vmatpush1.msra.mxu0 0.0
        %656 = vmatprep.subr.mxu0 0.0
        %657 = vmatpush1.msra.mxu0 0.0
        %658 = vmatprep.subr.mxu0 0.0
        %659 = vmatpush1.msra.mxu0 0.0
        %660 = vmatprep.subr.mxu0 0.0
        %661 = vmatpush1.msra.mxu0 0.0
        %662 = vmatprep.subr.mxu0 0.0
        %663 = vmatpush1.msra.mxu0 0.0
        %664 = vmatprep.subr.mxu0 0.0
        %665 = vmatpush1.msra.mxu0 0.0
        %666 = vmatprep.subr.mxu0 0.0
        %667 = vmatpush1.msra.mxu0 0.0
        %668 = vmatprep.subr.mxu0 0.0
        %669 = vmatpush1.msra.mxu0 0.0
        %670 = vmatprep.subr.mxu0 0.0
        %671 = vmatpush1.msra.mxu0 0.0
        %672 = vmatprep.subr.mxu0 0.0
        %673 = vmatpush1.msra.mxu0 0.0
        %674 = vmatprep.subr.mxu0 0.0
        %675 = vmatpush1.msra.mxu0 0.0
        %676 = vmatprep.subr.mxu0 0.0
        %677 = vmatpush1.msra.mxu0 0.0
        %678 = vmatprep.subr.mxu0 0.0
        %679 = vmatpush1.msra.mxu0 0.0
        %680 = vmatprep.subr.mxu0 0.0
        %681 = vmatpush1.msra.mxu0 0.0
        %682 = vmatprep.subr.mxu0 0.0
        %683 = vmatpush1.msra.mxu0 0.0
        %684 = vmatprep.subr.mxu0 0.0
        %685 = vmatpush1.msra.mxu0 0.0
        %686 = vmatprep.subr.mxu0 0.0
        %687 = vmatpush1.msra.mxu0 0.0
        %688 = vmatprep.subr.mxu0 0.0
        %689 = vmatpush1.msra.mxu0 0.0
        %690 = vmatprep.subr.mxu0 0.0
        %691 = vmatpush1.msra.mxu0 0.0
        %692 = vmatprep.subr.mxu0 0.0
        %693 = vmatpush1.msra.mxu0 0.0
        %694 = vmatprep.subr.mxu0 0.0
        %695 = vmatpush1.msra.mxu0 0.0
        %696 = vmatprep.subr.mxu0 0.0
        %697 = vmatpush1.msra.mxu0 0.0
        %698 = vmatprep.subr.mxu0 0.0
        %699 = vmatpush1.msra.mxu0 0.0
        %700 = vmatprep.subr.mxu0 0.0
        %701 = vmatpush1.msra.mxu0 0.0
        %702 = vmatprep.subr.mxu0 0.0
        %703 = vmatpush1.msra.mxu0 0.0
        %704 = vmatprep.subr.mxu0 0.0
        %705 = vmatpush1.msra.mxu0 0.0
        %706 = vmatprep.mubr.f32.mxu0 0.0
        %707 = vmatmul.mubr.f32.gmra.mrb[0].mxu0 %v640
        %v708 = vpop.f32.mrb[0].mxu0
        %v709 = vadd.f32 0.0, %v708
        %v710 = vpop.f32.mrb[0].mxu0
        %711 = vdwg.mxu0
        %v712 = vadd.f32 %v635, %v709
        %713 = vst.msk [vmem:[#allocation5] sm:$0xff] %vm528, %v712
        %714 = vst.msk [vmem:[#allocation3] sm:$0xff] %vm627, %v609
        %715 = vrot.lane.b32.xlu0 %v527, 120
        %v716 = vpop.permute.xlu0 %715
        %717 = vrot.lane.b32.xlu0 %v524, 120
        %v718 = vpop.permute.xlu0 %717
        %v719 = vsel %vm528, %v716, 0
        %v721 = vsel %vm528, %v718, 0
        %723 = vmatprep.subr.mxu0 0.0
        %724 = vmatpush1.xpose.msra.mxu0 %v721
        %725 = vmatprep.subr.mxu0 0.0
        %726 = vmatpush1.xpose.msra.mxu0 0.0
        %727 = vmatprep.subr.mxu0 0.0
        %728 = vmatpush1.xpose.msra.mxu0 0.0
        %729 = vmatprep.subr.mxu0 0.0
        %730 = vmatpush1.xpose.msra.mxu0 0.0
        %731 = vmatprep.subr.mxu0 0.0
        %732 = vmatpush1.xpose.msra.mxu0 0.0
        %733 = vmatprep.subr.mxu0 0.0
        %734 = vmatpush1.xpose.msra.mxu0 0.0
        %735 = vmatprep.subr.mxu0 0.0
        %736 = vmatpush1.xpose.msra.mxu0 0.0
        %737 = vmatprep.subr.mxu0 0.0
        %738 = vmatpush1.xpose.msra.mxu0 0.0
        %739 = vmatprep.subr.mxu0 0.0
        %740 = vmatpush1.xpose.msra.mxu0 0.0
        %741 = vmatprep.subr.mxu0 0.0
        %742 = vmatpush1.xpose.msra.mxu0 0.0
        %743 = vmatprep.subr.mxu0 0.0
        %744 = vmatpush1.xpose.msra.mxu0 0.0
        %745 = vmatprep.subr.mxu0 0.0
        %746 = vmatpush1.xpose.msra.mxu0 0.0
        %747 = vmatprep.subr.mxu0 0.0
        %748 = vmatpush1.xpose.msra.mxu0 0.0
        %749 = vmatprep.subr.mxu0 0.0
        %750 = vmatpush1.xpose.msra.mxu0 0.0
        %751 = vmatprep.subr.mxu0 0.0
        %752 = vmatpush1.xpose.msra.mxu0 0.0
        %753 = vmatprep.subr.mxu0 0.0
        %754 = vmatpush1.xpose.msra.mxu0 0.0
        %755 = vmatprep.subr.mxu0 0.0
        %756 = vmatpush1.xpose.msra.mxu0 0.0
        %757 = vmatprep.subr.mxu0 0.0
        %758 = vmatpush1.xpose.msra.mxu0 0.0
        %759 = vmatprep.subr.mxu0 0.0
        %760 = vmatpush1.xpose.msra.mxu0 0.0
        %761 = vmatprep.subr.mxu0 0.0
        %762 = vmatpush1.xpose.msra.mxu0 0.0
        %763 = vmatprep.subr.mxu0 0.0
        %764 = vmatpush1.xpose.msra.mxu0 0.0
        %765 = vmatprep.subr.mxu0 0.0
        %766 = vmatpush1.xpose.msra.mxu0 0.0
        %767 = vmatprep.subr.mxu0 0.0
        %768 = vmatpush1.xpose.msra.mxu0 0.0
        %769 = vmatprep.subr.mxu0 0.0
        %770 = vmatpush1.xpose.msra.mxu0 0.0
        %771 = vmatprep.subr.mxu0 0.0
        %772 = vmatpush1.xpose.msra.mxu0 0.0
        %773 = vmatprep.subr.mxu0 0.0
        %774 = vmatpush1.xpose.msra.mxu0 0.0
        %775 = vmatprep.subr.mxu0 0.0
        %776 = vmatpush1.xpose.msra.mxu0 0.0
        %777 = vmatprep.subr.mxu0 0.0
        %778 = vmatpush1.xpose.msra.mxu0 0.0
        %779 = vmatprep.subr.mxu0 0.0
        %780 = vmatpush1.xpose.msra.mxu0 0.0
        %781 = vmatprep.subr.mxu0 0.0
        %782 = vmatpush1.xpose.msra.mxu0 0.0
        %783 = vmatprep.subr.mxu0 0.0
        %784 = vmatpush1.xpose.msra.mxu0 0.0
        %785 = vmatprep.subr.mxu0 0.0
        %786 = vmatpush1.xpose.msra.mxu0 0.0
        %787 = vmatprep.mubr.f32.mxu0 0.0
        %788 = vmatmul.mubr.f32.gmra.mrb[0].mxu0 %v719
        %v789 = vpop.f32.mrb[0].mxu0
        %v790 = vadd.f32 0.0, %v789
        %v791 = vpop.f32.mrb[0].mxu0
        %792 = vdwg.mxu0
        %s793 = scalar_lea.vmem [#allocation3], 8
        %v794 = vld [vmem:[%s793] sm:$0xff]
        %v795 = vsel %vm528, %v790, -inf
        %796 = vmax.xlane.f32.xlu0 %v795
        %v797 = vpop.xlane.xlu0 %796
        %v798 = vmax.f32 %v794, %v797
        %v799 = vsub.f32 %v794, %v798
        %v800 = vmul.f32 %v799, 1.442695
        %v801 = vpow.pop %v800
        %803 = vset.pattern.permute.xlu0 0
        %804 = vperm.xlu0 %803, %v798
        %v805 = vpop.permute.xlu0 %804
        %v807 = vsub.f32 %v790, %v805
        %v808 = vmul.f32 %v807, 1.442695
        %v809 = vpow.pop %v808
        %s810 = scalar_lea.vmem [#allocation4], 8
        %v811 = vld [vmem:[%s810] sm:$0xff]
        %v812 = vmul.f32 %v801, %v811
        %v813 = vsel %vm528, %v809, 0.0
        %814 = vadd.xlane.f32.xlu0 %v813
        %v815 = vpop.xlane.xlu0 %814
        %v816 = vadd.f32 %v812, %v815
        %817 = vst.msk [vmem:[%s810] sm:$0xff] %vm627, %v816
        %s818 = scalar_lea.vmem [#allocation5], 8
        %v819 = vld [vmem:[%s818] sm:$0xff]
        %821 = vset.pattern.permute.xlu0 0
        %822 = vperm.xlu0 %821, %v801
        %v823 = vpop.permute.xlu0 %822
        %v825 = vmul.f32 %v823, %v819
        %826 = vrot.lane.b32.xlu0 %v524, 88
        %v827 = vpop.permute.xlu0 %826
        %v830 = vsel %vm528, %v809, 0
        %832 = vmatprep.subr.mxu0 0.0
        %833 = vmatpush1.msra.mxu0 %v827
        %834 = vmatprep.subr.mxu0 0.0
        %835 = vmatpush1.msra.mxu0 0.0
        %836 = vmatprep.subr.mxu0 0.0
        %837 = vmatpush1.msra.mxu0 0.0
        %838 = vmatprep.subr.mxu0 0.0
        %839 = vmatpush1.msra.mxu0 0.0
        %840 = vmatprep.subr.mxu0 0.0
        %841 = vmatpush1.msra.mxu0 0.0
        %842 = vmatprep.subr.mxu0 0.0
        %843 = vmatpush1.msra.mxu0 0.0
        %844 = vmatprep.subr.mxu0 0.0
        %845 = vmatpush1.msra.mxu0 0.0
        %846 = vmatprep.subr.mxu0 0.0
        %847 = vmatpush1.msra.mxu0 0.0
        %848 = vmatprep.subr.mxu0 0.0
        %849 = vmatpush1.msra.mxu0 0.0
        %850 = vmatprep.subr.mxu0 0.0
        %851 = vmatpush1.msra.mxu0 0.0
        %852 = vmatprep.subr.mxu0 0.0
        %853 = vmatpush1.msra.mxu0 0.0
        %854 = vmatprep.subr.mxu0 0.0
        %855 = vmatpush1.msra.mxu0 0.0
        %856 = vmatprep.subr.mxu0 0.0
        %857 = vmatpush1.msra.mxu0 0.0
        %858 = vmatprep.subr.mxu0 0.0
        %859 = vmatpush1.msra.mxu0 0.0
        %860 = vmatprep.subr.mxu0 0.0
        %861 = vmatpush1.msra.mxu0 0.0
        %862 = vmatprep.subr.mxu0 0.0
        %863 = vmatpush1.msra.mxu0 0.0
        %864 = vmatprep.subr.mxu0 0.0
        %865 = vmatpush1.msra.mxu0 0.0
        %866 = vmatprep.subr.mxu0 0.0
        %867 = vmatpush1.msra.mxu0 0.0
        %868 = vmatprep.subr.mxu0 0.0
        %869 = vmatpush1.msra.mxu0 0.0
        %870 = vmatprep.subr.mxu0 0.0
        %871 = vmatpush1.msra.mxu0 0.0
        %872 = vmatprep.subr.mxu0 0.0
        %873 = vmatpush1.msra.mxu0 0.0
        %874 = vmatprep.subr.mxu0 0.0
        %875 = vmatpush1.msra.mxu0 0.0
        %876 = vmatprep.subr.mxu0 0.0
        %877 = vmatpush1.msra.mxu0 0.0
        %878 = vmatprep.subr.mxu0 0.0
        %879 = vmatpush1.msra.mxu0 0.0
        %880 = vmatprep.subr.mxu0 0.0
        %881 = vmatpush1.msra.mxu0 0.0
        %882 = vmatprep.subr.mxu0 0.0
        %883 = vmatpush1.msra.mxu0 0.0
        %884 = vmatprep.subr.mxu0 0.0
        %885 = vmatpush1.msra.mxu0 0.0
        %886 = vmatprep.subr.mxu0 0.0
        %887 = vmatpush1.msra.mxu0 0.0
        %888 = vmatprep.subr.mxu0 0.0
        %889 = vmatpush1.msra.mxu0 0.0
        %890 = vmatprep.subr.mxu0 0.0
        %891 = vmatpush1.msra.mxu0 0.0
        %892 = vmatprep.subr.mxu0 0.0
        %893 = vmatpush1.msra.mxu0 0.0
        %894 = vmatprep.subr.mxu0 0.0
        %895 = vmatpush1.msra.mxu0 0.0
        %896 = vmatprep.mubr.f32.mxu0 0.0
        %897 = vmatmul.mubr.f32.gmra.mrb[0].mxu0 %v830
        %v898 = vpop.f32.mrb[0].mxu0
        %v899 = vadd.f32 0.0, %v898
        %v900 = vpop.f32.mrb[0].mxu0
        %901 = vdwg.mxu0
        %v902 = vadd.f32 %v825, %v899
        %903 = vst.msk [vmem:[%s818] sm:$0xff] %vm528, %v902
        %904 = vst.msk [vmem:[%s793] sm:$0xff] %vm627, %v798
        %905 = vrot.lane.b32.xlu0 %v527, 112
        %v906 = vpop.permute.xlu0 %905
        %907 = vrot.lane.b32.xlu0 %v524, 112
        %v908 = vpop.permute.xlu0 %907
        %v909 = vsel %vm528, %v906, 0
        %v911 = vsel %vm528, %v908, 0
        %913 = vmatprep.subr.mxu0 0.0
        %914 = vmatpush1.xpose.msra.mxu0 %v911
        %915 = vmatprep.subr.mxu0 0.0
        %916 = vmatpush1.xpose.msra.mxu0 0.0
        %917 = vmatprep.subr.mxu0 0.0
        %918 = vmatpush1.xpose.msra.mxu0 0.0
        %919 = vmatprep.subr.mxu0 0.0
        %920 = vmatpush1.xpose.msra.mxu0 0.0
        %921 = vmatprep.subr.mxu0 0.0
        %922 = vmatpush1.xpose.msra.mxu0 0.0
        %923 = vmatprep.subr.mxu0 0.0
        %924 = vmatpush1.xpose.msra.mxu0 0.0
        %925 = vmatprep.subr.mxu0 0.0
        %926 = vmatpush1.xpose.msra.mxu0 0.0
        %927 = vmatprep.subr.mxu0 0.0
        %928 = vmatpush1.xpose.msra.mxu0 0.0
        %929 = vmatprep.subr.mxu0 0.0
        %930 = vmatpush1.xpose.msra.mxu0 0.0
        %931 = vmatprep.subr.mxu0 0.0
        %932 = vmatpush1.xpose.msra.mxu0 0.0
        %933 = vmatprep.subr.mxu0 0.0
        %934 = vmatpush1.xpose.msra.mxu0 0.0
        %935 = vmatprep.subr.mxu0 0.0
        %936 = vmatpush1.xpose.msra.mxu0 0.0
        %937 = vmatprep.subr.mxu0 0.0
        %938 = vmatpush1.xpose.msra.mxu0 0.0
        %939 = vmatprep.subr.mxu0 0.0
        %940 = vmatpush1.xpose.msra.mxu0 0.0
        %941 = vmatprep.subr.mxu0 0.0
        %942 = vmatpush1.xpose.msra.mxu0 0.0
        %943 = vmatprep.subr.mxu0 0.0
        %944 = vmatpush1.xpose.msra.mxu0 0.0
        %945 = vmatprep.subr.mxu0 0.0
        %946 = vmatpush1.xpose.msra.mxu0 0.0
        %947 = vmatprep.subr.mxu0 0.0
        %948 = vmatpush1.xpose.msra.mxu0 0.0
        %949 = vmatprep.subr.mxu0 0.0
        %950 = vmatpush1.xpose.msra.mxu0 0.0
        %951 = vmatprep.subr.mxu0 0.0
        %952 = vmatpush1.xpose.msra.mxu0 0.0
        %953 = vmatprep.subr.mxu0 0.0
        %954 = vmatpush1.xpose.msra.mxu0 0.0
        %955 = vmatprep.subr.mxu0 0.0
        %956 = vmatpush1.xpose.msra.mxu0 0.0
        %957 = vmatprep.subr.mxu0 0.0
        %958 = vmatpush1.xpose.msra.mxu0 0.0
        %959 = vmatprep.subr.mxu0 0.0
        %960 = vmatpush1.xpose.msra.mxu0 0.0
        %961 = vmatprep.subr.mxu0 0.0
        %962 = vmatpush1.xpose.msra.mxu0 0.0
        %963 = vmatprep.subr.mxu0 0.0
        %964 = vmatpush1.xpose.msra.mxu0 0.0
        %965 = vmatprep.subr.mxu0 0.0
        %966 = vmatpush1.xpose.msra.mxu0 0.0
        %967 = vmatprep.subr.mxu0 0.0
        %968 = vmatpush1.xpose.msra.mxu0 0.0
        %969 = vmatprep.subr.mxu0 0.0
        %970 = vmatpush1.xpose.msra.mxu0 0.0
        %971 = vmatprep.subr.mxu0 0.0
        %972 = vmatpush1.xpose.msra.mxu0 0.0
        %973 = vmatprep.subr.mxu0 0.0
        %974 = vmatpush1.xpose.msra.mxu0 0.0
        %975 = vmatprep.subr.mxu0 0.0
        %976 = vmatpush1.xpose.msra.mxu0 0.0
        %977 = vmatprep.mubr.f32.mxu0 0.0
        %978 = vmatmul.mubr.f32.gmra.mrb[0].mxu0 %v909
        %v979 = vpop.f32.mrb[0].mxu0
        %v980 = vadd.f32 0.0, %v979
        %v981 = vpop.f32.mrb[0].mxu0
        %982 = vdwg.mxu0
        %s983 = scalar_lea.vmem [#allocation3], 16
        %v984 = vld [vmem:[%s983] sm:$0xff]
        %v985 = vsel %vm528, %v980, -inf
        %986 = vmax.xlane.f32.xlu0 %v985
        %v987 = vpop.xlane.xlu0 %986
        %v988 = vmax.f32 %v984, %v987
        %v989 = vsub.f32 %v984, %v988
        %v990 = vmul.f32 %v989, 1.442695
        %v991 = vpow.pop %v990
        %993 = vset.pattern.permute.xlu0 0
        %994 = vperm.xlu0 %993, %v988
        %v995 = vpop.permute.xlu0 %994
        %v997 = vsub.f32 %v980, %v995
        %v998 = vmul.f32 %v997, 1.442695
        %v999 = vpow.pop %v998
        %s1000 = scalar_lea.vmem [#allocation4], 16
        %v1001 = vld [vmem:[%s1000] sm:$0xff]
        %v1002 = vmul.f32 %v991, %v1001
        %v1003 = vsel %vm528, %v999, 0.0
        %1004 = vadd.xlane.f32.xlu0 %v1003
        %v1005 = vpop.xlane.xlu0 %1004
        %v1006 = vadd.f32 %v1002, %v1005
        %1007 = vst.msk [vmem:[%s1000] sm:$0xff] %vm627, %v1006
        %s1008 = scalar_lea.vmem [#allocation5], 16
        %v1009 = vld [vmem:[%s1008] sm:$0xff]
        %1011 = vset.pattern.permute.xlu0 0
        %1012 = vperm.xlu0 %1011, %v991
        %v1013 = vpop.permute.xlu0 %1012
        %v1015 = vmul.f32 %v1013, %v1009
        %1016 = vrot.lane.b32.xlu0 %v524, 80
        %v1017 = vpop.permute.xlu0 %1016
        %v1020 = vsel %vm528, %v999, 0
        %1022 = vmatprep.subr.mxu0 0.0
        %1023 = vmatpush1.msra.mxu0 %v1017
        %1024 = vmatprep.subr.mxu0 0.0
        %1025 = vmatpush1.msra.mxu0 0.0
        %1026 = vmatprep.subr.mxu0 0.0
        %1027 = vmatpush1.msra.mxu0 0.0
        %1028 = vmatprep.subr.mxu0 0.0
        %1029 = vmatpush1.msra.mxu0 0.0
        %1030 = vmatprep.subr.mxu0 0.0
        %1031 = vmatpush1.msra.mxu0 0.0
        %1032 = vmatprep.subr.mxu0 0.0
        %1033 = vmatpush1.msra.mxu0 0.0
        %1034 = vmatprep.subr.mxu0 0.0
        %1035 = vmatpush1.msra.mxu0 0.0
        %1036 = vmatprep.subr.mxu0 0.0
        %1037 = vmatpush1.msra.mxu0 0.0
        %1038 = vmatprep.subr.mxu0 0.0
        %1039 = vmatpush1.msra.mxu0 0.0
        %1040 = vmatprep.subr.mxu0 0.0
        %1041 = vmatpush1.msra.mxu0 0.0
        %1042 = vmatprep.subr.mxu0 0.0
        %1043 = vmatpush1.msra.mxu0 0.0
        %1044 = vmatprep.subr.mxu0 0.0
        %1045 = vmatpush1.msra.mxu0 0.0
        %1046 = vmatprep.subr.mxu0 0.0
        %1047 = vmatpush1.msra.mxu0 0.0
        %1048 = vmatprep.subr.mxu0 0.0
        %1049 = vmatpush1.msra.mxu0 0.0
        %1050 = vmatprep.subr.mxu0 0.0
        %1051 = vmatpush1.msra.mxu0 0.0
        %1052 = vmatprep.subr.mxu0 0.0
        %1053 = vmatpush1.msra.mxu0 0.0
        %1054 = vmatprep.subr.mxu0 0.0
        %1055 = vmatpush1.msra.mxu0 0.0
        %1056 = vmatprep.subr.mxu0 0.0
        %1057 = vmatpush1.msra.mxu0 0.0
        %1058 = vmatprep.subr.mxu0 0.0
        %1059 = vmatpush1.msra.mxu0 0.0
        %1060 = vmatprep.subr.mxu0 0.0
        %1061 = vmatpush1.msra.mxu0 0.0
        %1062 = vmatprep.subr.mxu0 0.0
        %1063 = vmatpush1.msra.mxu0 0.0
        %1064 = vmatprep.subr.mxu0 0.0
        %1065 = vmatpush1.msra.mxu0 0.0
        %1066 = vmatprep.subr.mxu0 0.0
        %1067 = vmatpush1.msra.mxu0 0.0
        %1068 = vmatprep.subr.mxu0 0.0
        %1069 = vmatpush1.msra.mxu0 0.0
        %1070 = vmatprep.subr.mxu0 0.0
        %1071 = vmatpush1.msra.mxu0 0.0
        %1072 = vmatprep.subr.mxu0 0.0
        %1073 = vmatpush1.msra.mxu0 0.0
        %1074 = vmatprep.subr.mxu0 0.0
        %1075 = vmatpush1.msra.mxu0 0.0
        %1076 = vmatprep.subr.mxu0 0.0
        %1077 = vmatpush1.msra.mxu0 0.0
        %1078 = vmatprep.subr.mxu0 0.0
        %1079 = vmatpush1.msra.mxu0 0.0
        %1080 = vmatprep.subr.mxu0 0.0
        %1081 = vmatpush1.msra.mxu0 0.0
        %1082 = vmatprep.subr.mxu0 0.0
        %1083 = vmatpush1.msra.mxu0 0.0
        %1084 = vmatprep.subr.mxu0 0.0
        %1085 = vmatpush1.msra.mxu0 0.0
        %1086 = vmatprep.mubr.f32.mxu0 0.0
        %1087 = vmatmul.mubr.f32.gmra.mrb[0].mxu0 %v1020
        %v1088 = vpop.f32.mrb[0].mxu0
        %v1089 = vadd.f32 0.0, %v1088
        %v1090 = vpop.f32.mrb[0].mxu0
        %1091 = vdwg.mxu0
        %v1092 = vadd.f32 %v1015, %v1089
        %1093 = vst.msk [vmem:[%s1008] sm:$0xff] %vm528, %v1092
        %1094 = vst.msk [vmem:[%s983] sm:$0xff] %vm627, %v988
        %1095 = vrot.lane.b32.xlu0 %v527, 104
        %v1096 = vpop.permute.xlu0 %1095
        %1097 = vrot.lane.b32.xlu0 %v524, 104
        %v1098 = vpop.permute.xlu0 %1097
        %v1099 = vsel %vm528, %v1096, 0
        %v1101 = vsel %vm528, %v1098, 0
        %1103 = vmatprep.subr.mxu0 0.0
        %1104 = vmatpush1.xpose.msra.mxu0 %v1101
        %1105 = vmatprep.subr.mxu0 0.0
        %1106 = vmatpush1.xpose.msra.mxu0 0.0
        %1107 = vmatprep.subr.mxu0 0.0
        %1108 = vmatpush1.xpose.msra.mxu0 0.0
        %1109 = vmatprep.subr.mxu0 0.0
        %1110 = vmatpush1.xpose.msra.mxu0 0.0
        %1111 = vmatprep.subr.mxu0 0.0
        %1112 = vmatpush1.xpose.msra.mxu0 0.0
        %1113 = vmatprep.subr.mxu0 0.0
        %1114 = vmatpush1.xpose.msra.mxu0 0.0
        %1115 = vmatprep.subr.mxu0 0.0
        %1116 = vmatpush1.xpose.msra.mxu0 0.0
        %1117 = vmatprep.subr.mxu0 0.0
        %1118 = vmatpush1.xpose.msra.mxu0 0.0
        %1119 = vmatprep.subr.mxu0 0.0
        %1120 = vmatpush1.xpose.msra.mxu0 0.0
        %1121 = vmatprep.subr.mxu0 0.0
        %1122 = vmatpush1.xpose.msra.mxu0 0.0
        %1123 = vmatprep.subr.mxu0 0.0
        %1124 = vmatpush1.xpose.msra.mxu0 0.0
        %1125 = vmatprep.subr.mxu0 0.0
        %1126 = vmatpush1.xpose.msra.mxu0 0.0
        %1127 = vmatprep.subr.mxu0 0.0
        %1128 = vmatpush1.xpose.msra.mxu0 0.0
        %1129 = vmatprep.subr.mxu0 0.0
        %1130 = vmatpush1.xpose.msra.mxu0 0.0
        %1131 = vmatprep.subr.mxu0 0.0
        %1132 = vmatpush1.xpose.msra.mxu0 0.0
        %1133 = vmatprep.subr.mxu0 0.0
        %1134 = vmatpush1.xpose.msra.mxu0 0.0
        %1135 = vmatprep.subr.mxu0 0.0
        %1136 = vmatpush1.xpose.msra.mxu0 0.0
        %1137 = vmatprep.subr.mxu0 0.0
        %1138 = vmatpush1.xpose.msra.mxu0 0.0
        %1139 = vmatprep.subr.mxu0 0.0
        %1140 = vmatpush1.xpose.msra.mxu0 0.0
        %1141 = vmatprep.subr.mxu0 0.0
        %1142 = vmatpush1.xpose.msra.mxu0 0.0
        %1143 = vmatprep.subr.mxu0 0.0
        %1144 = vmatpush1.xpose.msra.mxu0 0.0
        %1145 = vmatprep.subr.mxu0 0.0
        %1146 = vmatpush1.xpose.msra.mxu0 0.0
        %1147 = vmatprep.subr.mxu0 0.0
        %1148 = vmatpush1.xpose.msra.mxu0 0.0
        %1149 = vmatprep.subr.mxu0 0.0
        %1150 = vmatpush1.xpose.msra.mxu0 0.0
        %1151 = vmatprep.subr.mxu0 0.0
        %1152 = vmatpush1.xpose.msra.mxu0 0.0
        %1153 = vmatprep.subr.mxu0 0.0
        %1154 = vmatpush1.xpose.msra.mxu0 0.0
        %1155 = vmatprep.subr.mxu0 0.0
        %1156 = vmatpush1.xpose.msra.mxu0 0.0
        %1157 = vmatprep.subr.mxu0 0.0
        %1158 = vmatpush1.xpose.msra.mxu0 0.0
        %1159 = vmatprep.subr.mxu0 0.0
        %1160 = vmatpush1.xpose.msra.mxu0 0.0
        %1161 = vmatprep.subr.mxu0 0.0
        %1162 = vmatpush1.xpose.msra.mxu0 0.0
        %1163 = vmatprep.subr.mxu0 0.0
        %1164 = vmatpush1.xpose.msra.mxu0 0.0
        %1165 = vmatprep.subr.mxu0 0.0
        %1166 = vmatpush1.xpose.msra.mxu0 0.0
        %1167 = vmatprep.mubr.f32.mxu0 0.0
        %1168 = vmatmul.mubr.f32.gmra.mrb[0].mxu0 %v1099
        %v1169 = vpop.f32.mrb[0].mxu0
        %v1170 = vadd.f32 0.0, %v1169
        %v1171 = vpop.f32.mrb[0].mxu0
        %1172 = vdwg.mxu0
        %s1173 = scalar_lea.vmem [#allocation3], 24
        %v1174 = vld [vmem:[%s1173] sm:$0xff]
        %v1175 = vsel %vm528, %v1170, -inf
        %1176 = vmax.xlane.f32.xlu0 %v1175
        %v1177 = vpop.xlane.xlu0 %1176
        %v1178 = vmax.f32 %v1174, %v1177
        %v1179 = vsub.f32 %v1174, %v1178
        %v1180 = vmul.f32 %v1179, 1.442695
        %v1181 = vpow.pop %v1180
        %1183 = vset.pattern.permute.xlu0 0
        %1184 = vperm.xlu0 %1183, %v1178
        %v1185 = vpop.permute.xlu0 %1184
        %v1187 = vsub.f32 %v1170, %v1185
        %v1188 = vmul.f32 %v1187, 1.442695
        %v1189 = vpow.pop %v1188
        %s1190 = scalar_lea.vmem [#allocation4], 24
        %v1191 = vld [vmem:[%s1190] sm:$0xff]
        %v1192 = vmul.f32 %v1181, %v1191
        %v1193 = vsel %vm528, %v1189, 0.0
        %1194 = vadd.xlane.f32.xlu0 %v1193
        %v1195 = vpop.xlane.xlu0 %1194
        %v1196 = vadd.f32 %v1192, %v1195
        %1197 = vst.msk [vmem:[%s1190] sm:$0xff] %vm627, %v1196
        %s1198 = scalar_lea.vmem [#allocation5], 24
        %v1199 = vld [vmem:[%s1198] sm:$0xff]
        %1201 = vset.pattern.permute.xlu0 0
        %1202 = vperm.xlu0 %1201, %v1181
        %v1203 = vpop.permute.xlu0 %1202
        %v1205 = vmul.f32 %v1203, %v1199
        %1206 = vrot.lane.b32.xlu0 %v524, 72
        %v1207 = vpop.permute.xlu0 %1206
        %v1210 = vsel %vm528, %v1189, 0
        %1212 = vmatprep.subr.mxu0 0.0
        %1213 = vmatpush1.msra.mxu0 %v1207
        %1214 = vmatprep.subr.mxu0 0.0
        %1215 = vmatpush1.msra.mxu0 0.0
        %1216 = vmatprep.subr.mxu0 0.0
        %1217 = vmatpush1.msra.mxu0 0.0
        %1218 = vmatprep.subr.mxu0 0.0
        %1219 = vmatpush1.msra.mxu0 0.0
        %1220 = vmatprep.subr.mxu0 0.0
        %1221 = vmatpush1.msra.mxu0 0.0
        %1222 = vmatprep.subr.mxu0 0.0
        %1223 = vmatpush1.msra.mxu0 0.0
        %1224 = vmatprep.subr.mxu0 0.0
        %1225 = vmatpush1.msra.mxu0 0.0
        %1226 = vmatprep.subr.mxu0 0.0
        %1227 = vmatpush1.msra.mxu0 0.0
        %1228 = vmatprep.subr.mxu0 0.0
        %1229 = vmatpush1.msra.mxu0 0.0
        %1230 = vmatprep.subr.mxu0 0.0
        %1231 = vmatpush1.msra.mxu0 0.0
        %1232 = vmatprep.subr.mxu0 0.0
        %1233 = vmatpush1.msra.mxu0 0.0
        %1234 = vmatprep.subr.mxu0 0.0
        %1235 = vmatpush1.msra.mxu0 0.0
        %1236 = vmatprep.subr.mxu0 0.0
        %1237 = vmatpush1.msra.mxu0 0.0
        %1238 = vmatprep.subr.mxu0 0.0
        %1239 = vmatpush1.msra.mxu0 0.0
        %1240 = vmatprep.subr.mxu0 0.0
        %1241 = vmatpush1.msra.mxu0 0.0
        %1242 = vmatprep.subr.mxu0 0.0
        %1243 = vmatpush1.msra.mxu0 0.0
        %1244 = vmatprep.subr.mxu0 0.0
        %1245 = vmatpush1.msra.mxu0 0.0
        %1246 = vmatprep.subr.mxu0 0.0
        %1247 = vmatpush1.msra.mxu0 0.0
        %1248 = vmatprep.subr.mxu0 0.0
        %1249 = vmatpush1.msra.mxu0 0.0
        %1250 = vmatprep.subr.mxu0 0.0
        %1251 = vmatpush1.msra.mxu0 0.0
        %1252 = vmatprep.subr.mxu0 0.0
        %1253 = vmatpush1.msra.mxu0 0.0
        %1254 = vmatprep.subr.mxu0 0.0
        %1255 = vmatpush1.msra.mxu0 0.0
        %1256 = vmatprep.subr.mxu0 0.0
        %1257 = vmatpush1.msra.mxu0 0.0
        %1258 = vmatprep.subr.mxu0 0.0
        %1259 = vmatpush1.msra.mxu0 0.0
        %1260 = vmatprep.subr.mxu0 0.0
        %1261 = vmatpush1.msra.mxu0 0.0
        %1262 = vmatprep.subr.mxu0 0.0
        %1263 = vmatpush1.msra.mxu0 0.0
        %1264 = vmatprep.subr.mxu0 0.0
        %1265 = vmatpush1.msra.mxu0 0.0
        %1266 = vmatprep.subr.mxu0 0.0
        %1267 = vmatpush1.msra.mxu0 0.0
        %1268 = vmatprep.subr.mxu0 0.0
        %1269 = vmatpush1.msra.mxu0 0.0
        %1270 = vmatprep.subr.mxu0 0.0
        %1271 = vmatpush1.msra.mxu0 0.0
        %1272 = vmatprep.subr.mxu0 0.0
        %1273 = vmatpush1.msra.mxu0 0.0
        %1274 = vmatprep.subr.mxu0 0.0
        %1275 = vmatpush1.msra.mxu0 0.0
        %1276 = vmatprep.mubr.f32.mxu0 0.0
        %1277 = vmatmul.mubr.f32.gmra.mrb[0].mxu0 %v1210
        %v1278 = vpop.f32.mrb[0].mxu0
        %v1279 = vadd.f32 0.0, %v1278
        %v1280 = vpop.f32.mrb[0].mxu0
        %1281 = vdwg.mxu0
        %v1282 = vadd.f32 %v1205, %v1279
        %1283 = vst.msk [vmem:[%s1198] sm:$0xff] %vm528, %v1282
        %1284 = vst.msk [vmem:[%s1173] sm:$0xff] %vm627, %v1178
        %p1285 = scmp.eq.s32.totalorder %s33, 3
        // Predicated region
        $region65: #{tpu_custom_call.1} parent=39 // pred_check
          %p1286 = pneg %p1285
        $region66: #{tpu_custom_call.1} parent=39 // pred_check_branch
          %1288 = sbr.rel (%p1286) target = $region68
        $region67: #{tpu_custom_call.1} parent=39 // pred_region
          %v1289 = vld [vmem:[#allocation4] sm:$0xff]
          %v1290 = vrcp.pop %v1289
          %v1291 = vld [vmem:[#allocation5] sm:$0xff]
          %1293 = vset.pattern.permute.xlu0 0
          %1294 = vperm.xlu0 %1293, %v1290
          %v1295 = vpop.permute.xlu0 %1294
          %v1297 = vmul.f32 %v1291, %v1295
          %v1298 = vld [vmem:[#allocation14] sm:$0xff]
          %v1299 = vld [vmem:[%s810] sm:$0xff]
          %v1300 = vrcp.pop %v1299
          %v1301 = vld [vmem:[%s818] sm:$0xff]
          %1303 = vset.pattern.permute.xlu0 0
          %1304 = vperm.xlu0 %1303, %v1300
          %v1305 = vpop.permute.xlu0 %1304
          %v1307 = vmul.f32 %v1301, %v1305
          %v1308 = vld [vmem:[#allocation14 + $0x8] sm:$0xff]
          %v1310 = vsel %vm528, %v1307, 0
          %1312 = vmatprep.subr.mxu0 0.0
          %1313 = vmatpush1.msra.mxu0 %v1308
          %1314 = vmatprep.subr.mxu0 0.0
          %1315 = vmatpush1.msra.mxu0 0.0
          %1316 = vmatprep.subr.mxu0 0.0
          %1317 = vmatpush1.msra.mxu0 0.0
          %1318 = vmatprep.subr.mxu0 0.0
          %1319 = vmatpush1.msra.mxu0 0.0
          %1320 = vmatprep.subr.mxu0 0.0
          %1321 = vmatpush1.msra.mxu0 0.0
          %1322 = vmatprep.subr.mxu0 0.0
          %1323 = vmatpush1.msra.mxu0 0.0
          %1324 = vmatprep.subr.mxu0 0.0
          %1325 = vmatpush1.msra.mxu0 0.0
          %1326 = vmatprep.subr.mxu0 0.0
          %1327 = vmatpush1.msra.mxu0 0.0
          %1328 = vmatprep.subr.mxu0 0.0
          %1329 = vmatpush1.msra.mxu0 0.0
          %1330 = vmatprep.subr.mxu0 0.0
          %1331 = vmatpush1.msra.mxu0 0.0
          %1332 = vmatprep.subr.mxu0 0.0
          %1333 = vmatpush1.msra.mxu0 0.0
          %1334 = vmatprep.subr.mxu0 0.0
          %1335 = vmatpush1.msra.mxu0 0.0
          %1336 = vmatprep.subr.mxu0 0.0
          %1337 = vmatpush1.msra.mxu0 0.0
          %1338 = vmatprep.subr.mxu0 0.0
          %1339 = vmatpush1.msra.mxu0 0.0
          %1340 = vmatprep.subr.mxu0 0.0
          %1341 = vmatpush1.msra.mxu0 0.0
          %1342 = vmatprep.subr.mxu0 0.0
          %1343 = vmatpush1.msra.mxu0 0.0
          %1344 = vmatprep.subr.mxu0 0.0
          %1345 = vmatpush1.msra.mxu0 0.0
          %1346 = vmatprep.subr.mxu0 0.0
          %1347 = vmatpush1.msra.mxu0 0.0
          %1348 = vmatprep.subr.mxu0 0.0
          %1349 = vmatpush1.msra.mxu0 0.0
          %1350 = vmatprep.subr.mxu0 0.0
          %1351 = vmatpush1.msra.mxu0 0.0
          %1352 = vmatprep.subr.mxu0 0.0
          %1353 = vmatpush1.msra.mxu0 0.0
          %1354 = vmatprep.subr.mxu0 0.0
          %1355 = vmatpush1.msra.mxu0 0.0
          %1356 = vmatprep.subr.mxu0 0.0
          %1357 = vmatpush1.msra.mxu0 0.0
          %1358 = vmatprep.subr.mxu0 0.0
          %1359 = vmatpush1.msra.mxu0 0.0
          %1360 = vmatprep.subr.mxu0 0.0
          %1361 = vmatpush1.msra.mxu0 0.0
          %1362 = vmatprep.subr.mxu0 0.0
          %1363 = vmatpush1.msra.mxu0 0.0
          %1364 = vmatprep.subr.mxu0 0.0
          %1365 = vmatpush1.msra.mxu0 0.0
          %1366 = vmatprep.subr.mxu0 0.0
          %1367 = vmatpush1.msra.mxu0 0.0
          %1368 = vmatprep.subr.mxu0 0.0
          %1369 = vmatpush1.msra.mxu0 0.0
          %1370 = vmatprep.subr.mxu0 0.0
          %1371 = vmatpush1.msra.mxu0 0.0
          %1372 = vmatprep.subr.mxu0 0.0
          %1373 = vmatpush1.msra.mxu0 0.0
          %1374 = vmatprep.subr.mxu0 0.0
          %1375 = vmatpush1.msra.mxu0 0.0
          %1376 = vmatprep.mubr.f32.mxu0 0.0
          %1377 = vmatmul.mubr.f32.gmra.mrb[0].mxu0 %v1310
          %v1378 = vpop.f32.mrb[0].mxu0
          %v1379 = vadd.f32 0.0, %v1378
          %v1380 = vpop.f32.mrb[0].mxu0
          %1381 = vdwg.mxu0
          %v1383 = vsel %vm528, %v1297, 0
          %1385 = vmatprep.subr.mxu0 0.0
          %1386 = vmatpush1.msra.mxu0 %v1298
          %1387 = vmatprep.subr.mxu0 0.0
          %1388 = vmatpush1.msra.mxu0 0.0
          %1389 = vmatprep.subr.mxu0 0.0
          %1390 = vmatpush1.msra.mxu0 0.0
          %1391 = vmatprep.subr.mxu0 0.0
          %1392 = vmatpush1.msra.mxu0 0.0
          %1393 = vmatprep.subr.mxu0 0.0
          %1394 = vmatpush1.msra.mxu0 0.0
          %1395 = vmatprep.subr.mxu0 0.0
          %1396 = vmatpush1.msra.mxu0 0.0
          %1397 = vmatprep.subr.mxu0 0.0
          %1398 = vmatpush1.msra.mxu0 0.0
          %1399 = vmatprep.subr.mxu0 0.0
          %1400 = vmatpush1.msra.mxu0 0.0
          %1401 = vmatprep.subr.mxu0 0.0
          %1402 = vmatpush1.msra.mxu0 0.0
          %1403 = vmatprep.subr.mxu0 0.0
          %1404 = vmatpush1.msra.mxu0 0.0
          %1405 = vmatprep.subr.mxu0 0.0
          %1406 = vmatpush1.msra.mxu0 0.0
          %1407 = vmatprep.subr.mxu0 0.0
          %1408 = vmatpush1.msra.mxu0 0.0
          %1409 = vmatprep.subr.mxu0 0.0
          %1410 = vmatpush1.msra.mxu0 0.0
          %1411 = vmatprep.subr.mxu0 0.0
          %1412 = vmatpush1.msra.mxu0 0.0
          %1413 = vmatprep.subr.mxu0 0.0
          %1414 = vmatpush1.msra.mxu0 0.0
          %1415 = vmatprep.subr.mxu0 0.0
          %1416 = vmatpush1.msra.mxu0 0.0
          %1417 = vmatprep.subr.mxu0 0.0
          %1418 = vmatpush1.msra.mxu0 0.0
          %1419 = vmatprep.subr.mxu0 0.0
          %1420 = vmatpush1.msra.mxu0 0.0
          %1421 = vmatprep.subr.mxu0 0.0
          %1422 = vmatpush1.msra.mxu0 0.0
          %1423 = vmatprep.subr.mxu0 0.0
          %1424 = vmatpush1.msra.mxu0 0.0
          %1425 = vmatprep.subr.mxu0 0.0
          %1426 = vmatpush1.msra.mxu0 0.0
          %1427 = vmatprep.subr.mxu0 0.0
          %1428 = vmatpush1.msra.mxu0 0.0
          %1429 = vmatprep.subr.mxu0 0.0
          %1430 = vmatpush1.msra.mxu0 0.0
          %1431 = vmatprep.subr.mxu0 0.0
          %1432 = vmatpush1.msra.mxu0 0.0
          %1433 = vmatprep.subr.mxu0 0.0
          %1434 = vmatpush1.msra.mxu0 0.0
          %1435 = vmatprep.subr.mxu0 0.0
          %1436 = vmatpush1.msra.mxu0 0.0
          %1437 = vmatprep.subr.mxu0 0.0
          %1438 = vmatpush1.msra.mxu0 0.0
          %1439 = vmatprep.subr.mxu0 0.0
          %1440 = vmatpush1.msra.mxu0 0.0
          %1441 = vmatprep.subr.mxu0 0.0
          %1442 = vmatpush1.msra.mxu0 0.0
          %1443 = vmatprep.subr.mxu0 0.0
          %1444 = vmatpush1.msra.mxu0 0.0
          %1445 = vmatprep.subr.mxu0 0.0
          %1446 = vmatpush1.msra.mxu0 0.0
          %1447 = vmatprep.subr.mxu0 0.0
          %1448 = vmatpush1.msra.mxu0 0.0
          %1449 = vmatprep.mubr.f32.mxu0 0.0
          %1450 = vmatmul.mubr.f32.gmra.mrb[0].mxu0 %v1383
          %v1451 = vpop.f32.mrb[0].mxu0
          %v1452 = vadd.f32 %v1379, %v1451
          %v1453 = vpop.f32.mrb[0].mxu0
          %1454 = vdwg.mxu0
          %v1455 = vld [vmem:[%s1000] sm:$0xff]
          %v1456 = vrcp.pop %v1455
          %v1457 = vld [vmem:[%s1008] sm:$0xff]
          %1459 = vset.pattern.permute.xlu0 0
          %1460 = vperm.xlu0 %1459, %v1456
          %v1461 = vpop.permute.xlu0 %1460
          %v1463 = vmul.f32 %v1457, %v1461
          %v1464 = vld [vmem:[#allocation14 + $0x10] sm:$0xff]
          %v1466 = vsel %vm528, %v1463, 0
          %1468 = vmatprep.subr.mxu0 0.0
          %1469 = vmatpush1.msra.mxu0 %v1464
          %1470 = vmatprep.subr.mxu0 0.0
          %1471 = vmatpush1.msra.mxu0 0.0
          %1472 = vmatprep.subr.mxu0 0.0
          %1473 = vmatpush1.msra.mxu0 0.0
          %1474 = vmatprep.subr.mxu0 0.0
          %1475 = vmatpush1.msra.mxu0 0.0
          %1476 = vmatprep.subr.mxu0 0.0
          %1477 = vmatpush1.msra.mxu0 0.0
          %1478 = vmatprep.subr.mxu0 0.0
          %1479 = vmatpush1.msra.mxu0 0.0
          %1480 = vmatprep.subr.mxu0 0.0
          %1481 = vmatpush1.msra.mxu0 0.0
          %1482 = vmatprep.subr.mxu0 0.0
          %1483 = vmatpush1.msra.mxu0 0.0
          %1484 = vmatprep.subr.mxu0 0.0
          %1485 = vmatpush1.msra.mxu0 0.0
          %1486 = vmatprep.subr.mxu0 0.0
          %1487 = vmatpush1.msra.mxu0 0.0
          %1488 = vmatprep.subr.mxu0 0.0
          %1489 = vmatpush1.msra.mxu0 0.0
          %1490 = vmatprep.subr.mxu0 0.0
          %1491 = vmatpush1.msra.mxu0 0.0
          %1492 = vmatprep.subr.mxu0 0.0
          %1493 = vmatpush1.msra.mxu0 0.0
          %1494 = vmatprep.subr.mxu0 0.0
          %1495 = vmatpush1.msra.mxu0 0.0
          %1496 = vmatprep.subr.mxu0 0.0
          %1497 = vmatpush1.msra.mxu0 0.0
          %1498 = vmatprep.subr.mxu0 0.0
          %1499 = vmatpush1.msra.mxu0 0.0
          %1500 = vmatprep.subr.mxu0 0.0
          %1501 = vmatpush1.msra.mxu0 0.0
          %1502 = vmatprep.subr.mxu0 0.0
          %1503 = vmatpush1.msra.mxu0 0.0
          %1504 = vmatprep.subr.mxu0 0.0
          %1505 = vmatpush1.msra.mxu0 0.0
          %1506 = vmatprep.subr.mxu0 0.0
          %1507 = vmatpush1.msra.mxu0 0.0
          %1508 = vmatprep.subr.mxu0 0.0
          %1509 = vmatpush1.msra.mxu0 0.0
          %1510 = vmatprep.subr.mxu0 0.0
          %1511 = vmatpush1.msra.mxu0 0.0
          %1512 = vmatprep.subr.mxu0 0.0
          %1513 = vmatpush1.msra.mxu0 0.0
          %1514 = vmatprep.subr.mxu0 0.0
          %1515 = vmatpush1.msra.mxu0 0.0
          %1516 = vmatprep.subr.mxu0 0.0
          %1517 = vmatpush1.msra.mxu0 0.0
          %1518 = vmatprep.subr.mxu0 0.0
          %1519 = vmatpush1.msra.mxu0 0.0
          %1520 = vmatprep.subr.mxu0 0.0
          %1521 = vmatpush1.msra.mxu0 0.0
          %1522 = vmatprep.subr.mxu0 0.0
          %1523 = vmatpush1.msra.mxu0 0.0
          %1524 = vmatprep.subr.mxu0 0.0
          %1525 = vmatpush1.msra.mxu0 0.0
          %1526 = vmatprep.subr.mxu0 0.0
          %1527 = vmatpush1.msra.mxu0 0.0
          %1528 = vmatprep.subr.mxu0 0.0
          %1529 = vmatpush1.msra.mxu0 0.0
          %1530 = vmatprep.subr.mxu0 0.0
          %1531 = vmatpush1.msra.mxu0 0.0
          %1532 = vmatprep.mubr.f32.mxu0 0.0
          %1533 = vmatmul.mubr.f32.gmra.mrb[0].mxu0 %v1466
          %v1534 = vpop.f32.mrb[0].mxu0
          %v1535 = vadd.f32 0.0, %v1534
          %v1536 = vpop.f32.mrb[0].mxu0
          %1537 = vdwg.mxu0
          %v1538 = vadd.f32 %v1452, %v1535
          %v1539 = vld [vmem:[%s1190] sm:$0xff]
          %v1540 = vrcp.pop %v1539
          %v1541 = vld [vmem:[%s1198] sm:$0xff]
          %1543 = vset.pattern.permute.xlu0 0
          %1544 = vperm.xlu0 %1543, %v1540
          %v1545 = vpop.permute.xlu0 %1544
          %v1547 = vmul.f32 %v1541, %v1545
          %v1548 = vld [vmem:[#allocation14 + $0x18] sm:$0xff]
          %v1550 = vsel %vm528, %v1547, 0
          %1552 = vmatprep.subr.mxu0 0.0
          %1553 = vmatpush1.msra.mxu0 %v1548
          %1554 = vmatprep.subr.mxu0 0.0
          %1555 = vmatpush1.msra.mxu0 0.0
          %1556 = vmatprep.subr.mxu0 0.0
          %1557 = vmatpush1.msra.mxu0 0.0
          %1558 = vmatprep.subr.mxu0 0.0
          %1559 = vmatpush1.msra.mxu0 0.0
          %1560 = vmatprep.subr.mxu0 0.0
          %1561 = vmatpush1.msra.mxu0 0.0
          %1562 = vmatprep.subr.mxu0 0.0
          %1563 = vmatpush1.msra.mxu0 0.0
          %1564 = vmatprep.subr.mxu0 0.0
          %1565 = vmatpush1.msra.mxu0 0.0
          %1566 = vmatprep.subr.mxu0 0.0
          %1567 = vmatpush1.msra.mxu0 0.0
          %1568 = vmatprep.subr.mxu0 0.0
          %1569 = vmatpush1.msra.mxu0 0.0
          %1570 = vmatprep.subr.mxu0 0.0
          %1571 = vmatpush1.msra.mxu0 0.0
          %1572 = vmatprep.subr.mxu0 0.0
          %1573 = vmatpush1.msra.mxu0 0.0
          %1574 = vmatprep.subr.mxu0 0.0
          %1575 = vmatpush1.msra.mxu0 0.0
          %1576 = vmatprep.subr.mxu0 0.0
          %1577 = vmatpush1.msra.mxu0 0.0
          %1578 = vmatprep.subr.mxu0 0.0
          %1579 = vmatpush1.msra.mxu0 0.0
          %1580 = vmatprep.subr.mxu0 0.0
          %1581 = vmatpush1.msra.mxu0 0.0
          %1582 = vmatprep.subr.mxu0 0.0
          %1583 = vmatpush1.msra.mxu0 0.0
          %1584 = vmatprep.subr.mxu0 0.0
          %1585 = vmatpush1.msra.mxu0 0.0
          %1586 = vmatprep.subr.mxu0 0.0
          %1587 = vmatpush1.msra.mxu0 0.0
          %1588 = vmatprep.subr.mxu0 0.0
          %1589 = vmatpush1.msra.mxu0 0.0
          %1590 = vmatprep.subr.mxu0 0.0
          %1591 = vmatpush1.msra.mxu0 0.0
          %1592 = vmatprep.subr.mxu0 0.0
          %1593 = vmatpush1.msra.mxu0 0.0
          %1594 = vmatprep.subr.mxu0 0.0
          %1595 = vmatpush1.msra.mxu0 0.0
          %1596 = vmatprep.subr.mxu0 0.0
          %1597 = vmatpush1.msra.mxu0 0.0
          %1598 = vmatprep.subr.mxu0 0.0
          %1599 = vmatpush1.msra.mxu0 0.0
          %1600 = vmatprep.subr.mxu0 0.0
          %1601 = vmatpush1.msra.mxu0 0.0
          %1602 = vmatprep.subr.mxu0 0.0
          %1603 = vmatpush1.msra.mxu0 0.0
          %1604 = vmatprep.subr.mxu0 0.0
          %1605 = vmatpush1.msra.mxu0 0.0
          %1606 = vmatprep.subr.mxu0 0.0
          %1607 = vmatpush1.msra.mxu0 0.0
          %1608 = vmatprep.subr.mxu0 0.0
          %1609 = vmatpush1.msra.mxu0 0.0
          %1610 = vmatprep.subr.mxu0 0.0
          %1611 = vmatpush1.msra.mxu0 0.0
          %1612 = vmatprep.subr.mxu0 0.0
          %1613 = vmatpush1.msra.mxu0 0.0
          %1614 = vmatprep.subr.mxu0 0.0
          %1615 = vmatpush1.msra.mxu0 0.0
          %1616 = vmatprep.mubr.f32.mxu0 0.0
          %1617 = vmatmul.mubr.f32.gmra.mrb[0].mxu0 %v1550
          %v1618 = vpop.f32.mrb[0].mxu0
          %v1619 = vadd.f32 0.0, %v1618
          %v1620 = vpop.f32.mrb[0].mxu0
          %1621 = vdwg.mxu0
          %v1622 = vadd.f32 %v1538, %v1619
          %1623 = vst.msk [vmem:[%s348] sm:$0xff] %vm453, %v1622
        $region68: #{tpu_custom_call.1} parent=39 // pred_fallthru
          _
        %s1624 = sand.u32 %s174, 1
        %s1625 = scalar_lea.sflag [#allocation8], %s1624
        %s1626 = sand.u32 %s174, 1
        %s1627 = smul.addr %s1626, 8
        %s1628 = scalar_lea.vmem [#allocation15], %s1627
        // Predicated region
        $region69: #{tpu_custom_call.1} parent=39 // pred_check
          %p1629 = pneg %p184
        $region70: #{tpu_custom_call.1} parent=39 // pred_check_branch
          %1631 = sbr.rel (%p1629) target = $region72
        $region71: #{tpu_custom_call.1} parent=39 // pred_region
          %s1633 = ssub.s32 128, 128
          %1634 = vsyncadd %s1625, %s1633
          %s1635 = smul.addr %s31, 4
          %s1636 = sadd.s32 %s32, %s1635
          %s1637 = smul.addr %s1636, 128
          %s1638 = scalar_lea.hbm %s5, %s1637
          %s1640 = sshll.u32 %s1628, 4
          %s1641 = int_to_ptr.vmem [resolvable:$true] %s1640
          %1643 = dma.vmem_to_hbm [thread:$0]  %s1641, 128, %s1638, %s1625
        $region72: #{tpu_custom_call.1} parent=39 // pred_fallthru
          _
      $region40: #{tpu_custom_call.1} parent=5 // pred_fallthru
        _
      %p1644 = scmp.le.s32.totalorder 2, %s21
      // Predicated region
      $region73: #{tpu_custom_call.1} parent=5 // pred_check
        %p1645 = pneg %p1644
      $region74: #{tpu_custom_call.1} parent=5 // pred_check_branch
        %1647 = sbr.rel (%p1645) target = $region76
      $region75: #{tpu_custom_call.1} parent=5 // pred_region
        %s1648 = ssub.s32 %s21, 2
        // Predicated region
        $region77: #{tpu_custom_call.1} parent=75 // pred_check
          %p1649 = pneg %p190
        $region78: #{tpu_custom_call.1} parent=75 // pred_check_branch
          %1651 = sbr.rel (%p1649) target = $region80
        $region79: #{tpu_custom_call.1} parent=75 // pred_region
          %s1652 = sand.u32 %s175, 1
          %s1653 = scalar_lea.sflag [#allocation8], %s1652
          %s1654 = sand.u32 %s175, 1
          %s1655 = smul.addr %s1654, 8
          %s1656 = scalar_lea.vmem [#allocation15], %s1655
          %1657 = dma.done %s1653, 128
        $region80: #{tpu_custom_call.1} parent=75 // pred_fallthru
          _
      $region76: #{tpu_custom_call.1} parent=5 // pred_fallthru
        _
    $region6: #{tpu_custom_call.1} parent=1 // loop_footer
      %s25 = sadd.s32 1, %s21
    $region7: #{tpu_custom_call.1} parent=1 // loop_footer_branch
      %20 = sbr.rel target = $region3
    $region8: #{tpu_custom_call.1} parent=1 // loop_exit
      _
    %1658 = vsyncpa [#allocation7], 1
    %s1659 = scalar_lea.sflag [#allocation7], 1
    %1660 = vsyncpa %s1659, 1
    %1661 = vsyncpa [#allocation10], 1
    %s1662 = scalar_lea.sflag [#allocation10], 1
    %1663 = vsyncpa %s1662, 1
    %1664 = vsyncpa [#allocation13], 1
    %1665 = vsyncpa [#allocation8], 1
    %s1666 = scalar_lea.sflag [#allocation8], 1
    %1667 = vsyncpa %s1666, 1

</llo_original>
